<compile_context>
chip_gen: v7x
topology: tpu7x:2x2x1
jax: 0.10.0
libtpu: 0.0.40
codegen_flags: <defaults>
</compile_context>

<pallas_src>
import functools

import jax
import jax.numpy as jnp
from jax.experimental import pallas as pl
from jax.experimental.pallas import tpu as pltpu


# ----------------------------------------------------------------------------
# Pallas kernels
# ----------------------------------------------------------------------------
def _xw_kernel(x_ref, w_ref, o_ref):
    """Row tile of XW = X @ W_eff (BN scale already folded into W_eff)."""
    o_ref[...] = jnp.dot(
        x_ref[...], w_ref[...], preferred_element_type=jnp.float32
    ).astype(o_ref.dtype)


def _agg_hidden_kernel(a_ref, xw_ref, shift_ref, o_ref, acc_ref, *,
                       tk, xw_resident):
    """Hidden layer: acc = shift; acc += A_tile @ XW_tile; out = relu(acc)."""
    k = pl.program_id(1)

    @pl.when(k == 0)
    def _():
        acc_ref[...] = jnp.broadcast_to(shift_ref[...], acc_ref.shape)

    if xw_resident:
        start = pl.multiple_of(k * tk, tk)
        xw = xw_ref[pl.ds(start, tk), :]
    else:
        xw = xw_ref[...]
    acc_ref[...] += jnp.dot(a_ref[...], xw, preferred_element_type=jnp.float32)

    @pl.when(k == pl.num_programs(1) - 1)
    def _():
        o_ref[...] = jnp.maximum(acc_ref[...], 0.0).astype(o_ref.dtype)


def _agg_final_kernel(a_ref, xw_ref, shift_ref, o_ref, *,
                      tk, xw_resident, mode, n_valid):
    """Final layer: accumulate directly into the resident f32 output tile."""
    k = pl.program_id(1)

    @pl.when(k == 0)
    def _():
        o_ref[...] = jnp.broadcast_to(shift_ref[...], o_ref.shape)

    if xw_resident:
        start = pl.multiple_of(k * tk, tk)
        xw = xw_ref[pl.ds(start, tk), :]
    else:
        xw = xw_ref[...]
    o_ref[...] += jnp.dot(a_ref[...], xw, preferred_element_type=jnp.float32)

    if mode == "log_softmax":
        @pl.when(k == pl.num_programs(1) - 1)
        def _():
            h = o_ref[...]
            # Mask padded class lanes to -inf before max / logsumexp.
            lane = jax.lax.broadcasted_iota(jnp.int32, h.shape, 1)
            h = jnp.where(lane < n_valid, h, -jnp.inf)
            m = jnp.max(h, axis=-1, keepdims=True)
            s = h - m
            lse = jnp.log(jnp.sum(jnp.exp(s), axis=-1, keepdims=True))
            o_ref[...] = s - lse
    # mode == "none": o_ref already holds A_hat @ XW + shift.


# ----------------------------------------------------------------------------
# pallas_call wrappers
# ----------------------------------------------------------------------------
_XW_VMEM_LIMIT = 32 * 1024 * 1024
_AGG_VMEM_LIMIT = 48 * 1024 * 1024            # fits v7x (64 MiB) with headroom
_XW_RESIDENT_BUDGET = 12 * 1024 * 1024        # XW bytes (assume 2x buffering)


def _xw_matmul(x_bf16, w_bf16, *, tm):
    n_pad, cin_pad = x_bf16.shape
    cout_pad = w_bf16.shape[1]
    return pl.pallas_call(
        _xw_kernel,
        out_shape=jax.ShapeDtypeStruct((n_pad, cout_pad), jnp.bfloat16),
        grid_spec=pltpu.PrefetchScalarGridSpec(
            num_scalar_prefetch=0,
            grid=(n_pad // tm,),
            in_specs=[
                pl.BlockSpec((tm, cin_pad), lambda i: (i, 0)),
                pl.BlockSpec((cin_pad, cout_pad), lambda i: (0, 0)),
            ],
            out_specs=pl.BlockSpec((tm, cout_pad), lambda i: (i, 0)),
        ),
        compiler_params=pltpu.CompilerParams(
            dimension_semantics=("parallel",),
            vmem_limit_bytes=_XW_VMEM_LIMIT),
    )(x_bf16, w_bf16)


def _gcn_agg_layer(a_bf16, xw_bf16, shift_f32, *, mode, n_valid, tm, tk):
    n_pad = a_bf16.shape[0]
    c_pad = xw_bf16.shape[1]

    # Keep XW resident in VMEM when it fits (removes HBM re-streaming of XW
    # once per row tile); fall back to streaming (tk, c_pad) blocks otherwise.
    xw_resident = (n_pad * c_pad * 2) <= _XW_RESIDENT_BUDGET
    if xw_resident:
        xw_spec = pl.BlockSpec((n_pad, c_pad), lambda i, k: (0, 0))
    else:
        xw_spec = pl.BlockSpec((tk, c_pad), lambda i, k: (k, 0))

    in_specs = [
        pl.BlockSpec((tm, tk), lambda i, k: (i, k)),      # A_hat tile
        xw_spec,                                          # XW (resident/stream)
        pl.BlockSpec((1, c_pad), lambda i, k: (0, 0)),    # folded bias+BN shift
    ]
    out_spec = pl.BlockSpec((tm, c_pad), lambda i, k: (i, 0))
    cp = pltpu.CompilerParams(
        dimension_semantics=("parallel", "arbitrary"),
        vmem_limit_bytes=_AGG_VMEM_LIMIT)
    grid = (n_pad // tm, n_pad // tk)                     # reduction axis last

    if mode == "relu":
        kernel = functools.partial(_agg_hidden_kernel, tk=tk,
                                   xw_resident=xw_resident)
        return pl.pallas_call(
            kernel,
            out_shape=jax.ShapeDtypeStruct((n_pad, c_pad), jnp.bfloat16),
            grid_spec=pltpu.PrefetchScalarGridSpec(
                num_scalar_prefetch=0, grid=grid,
                in_specs=in_specs, out_specs=out_spec,
                scratch_shapes=[pltpu.VMEM((tm, c_pad), jnp.float32)],
            ),
            compiler_params=cp,
        )(a_bf16, xw_bf16, shift_f32)

    kernel = functools.partial(_agg_final_kernel, tk=tk,
                               xw_resident=xw_resident,
                               mode=mode, n_valid=n_valid)
    return pl.pallas_call(
        kernel,
        out_shape=jax.ShapeDtypeStruct((n_pad, c_pad), jnp.float32),
        grid_spec=pltpu.PrefetchScalarGridSpec(
            num_scalar_prefetch=0, grid=grid,
            in_specs=in_specs, out_specs=out_spec,
        ),
        compiler_params=cp,
    )(a_bf16, xw_bf16, shift_f32)


# ----------------------------------------------------------------------------
# Model: parameters + forward
# ----------------------------------------------------------------------------
def init_gcn_params(key, in_channels, hidden_channels, out_channels,
                    total_num_layers):
    """Deterministic synthetic parameters matching GCN_Model.__init__ shapes."""
    assert total_num_layers > 0
    if total_num_layers == 1:
        dims = [(in_channels, out_channels)]
    else:
        dims = [(in_channels, hidden_channels)]
        dims += [(hidden_channels, hidden_channels)] * (total_num_layers - 2)
        dims += [(hidden_channels, out_channels)]

    params = {"convs": [], "bns": []}
    for li, (cin, cout) in enumerate(dims):
        key, kw, kb = jax.random.split(key, 3)
        w = jax.random.normal(kw, (cin, cout), jnp.float32) * (1.0 / jnp.sqrt(cin))
        b = jax.random.normal(kb, (1, cout), jnp.float32) * 0.1
        params["convs"].append({"w": w, "b": b})
        if li < len(dims) - 1:  # BN only after non-final layers
            key, kg, kbeta, km, kv = jax.random.split(key, 5)
            gamma = 1.0 + 0.1 * jax.random.normal(kg, (1, cout), jnp.float32)
            beta = 0.1 * jax.random.normal(kbeta, (1, cout), jnp.float32)
            rmean = 0.1 * jax.random.normal(km, (1, cout), jnp.float32)
            rvar = jnp.abs(1.0 + 0.1 * jax.random.normal(kv, (1, cout), jnp.float32))
            params["bns"].append(
                {"gamma": gamma, "beta": beta, "mean": rmean, "var": rvar})
    return params


def gcn_norm_dense(adj):
    """A_hat = D^-1/2 (A + I) D^-1/2  (PyG gcn_norm with add_self_loops)."""
    n = adj.shape[0]
    a = adj + jnp.eye(n, dtype=adj.dtype)
    deg = jnp.sum(a, axis=1)
    dinv = jnp.where(deg > 0, 1.0 / jnp.sqrt(deg), 0.0)
    return a * dinv[:, None] * dinv[None, :]


def _round_up(x, m):
    return ((x + m - 1) // m) * m


def _pad2(x, rows, cols):
    return jnp.pad(x, ((0, rows - x.shape[0]), (0, cols - x.shape[1])))


def _pick_tiles(n, tm_target=256, tk_target=1024):
    """Tile sizes as powers-of-two multiples of 128 (so max(tm,tk) is a common
    multiple and the grid divisions are exact), clamped to the graph size and
    keeping >= 2 row tiles when possible (v7x has 2 TensorCores)."""
    n128 = _round_up(n, 128)

    def cap(target):
        t = 128
        while t * 2 <= min(target, n128):
            t *= 2
        return t

    tk = cap(tk_target)
    tm = cap(tm_target)
    n_pad = _round_up(n, max(tm, tk))
    while tm > 128 and n_pad // tm < 2:
        tm //= 2
    return tm, tk, n_pad


def prepare_adjacency(a_hat, n_pad):
    """Pad + bf16-cast A_hat once (hoisted out of the forward pass)."""
    return _pad2(a_hat, n_pad, n_pad).astype(jnp.bfloat16)


@functools.partial(jax.jit,
                   static_argnames=("log_soft_max_last_layer", "tm", "tk"))
def gcn_forward_padded(params, x_pad, a_pad, log_soft_max_last_layer=True,
                       tm=256, tk=1024):
    """Forward on pre-padded inputs. x_pad: (n_pad, cin_pad) bf16,
    a_pad: (n_pad, n_pad) bf16. Returns padded (n_pad, cout_pad) f32."""
    eps = 1e-5
    n_layers = len(params["convs"])
    x_cur = x_pad

    for i in range(n_layers):
        conv = params["convs"][i]
        w, b = conv["w"], conv["b"]
        cin, cout = w.shape
        cin_pad, cout_pad = _round_up(cin, 128), _round_up(cout, 128)
        is_last = (i == n_layers - 1)

        if not is_last:
            bn = params["bns"][i]
            inv_std = 1.0 / jnp.sqrt(bn["var"] + eps)
            scale = bn["gamma"] * inv_std                        # (1, cout)
            shift = bn["beta"] - bn["mean"] * scale + b * scale  # fused bias+BN
            w_eff = w * scale                                    # BN scale -> W
            mode = "relu"
        else:
            shift = b
            w_eff = w
            mode = "log_softmax" if log_soft_max_last_layer else "none"

        # Padded lanes of W/shift are zero -> padded output channels stay zero.
        w_padded = _pad2(w_eff, cin_pad, cout_pad).astype(jnp.bfloat16)
        shift_padded = _pad2(shift, 1, cout_pad).astype(jnp.float32)

        xw = _xw_matmul(x_cur, w_padded, tm=tm)        # (n_pad, cout_pad) bf16
        x_cur = _gcn_agg_layer(a_pad, xw, shift_padded,
                               mode=mode, n_valid=cout, tm=tm, tk=tk)
        # F.dropout(training=False) -> identity (eval mode).

    return x_cur


def gcn_forward(params, x, a_hat, log_soft_max_last_layer=True,
                tm_target=256, tk_target=1024):
    """Convenience wrapper: pads inputs, runs, slices back. For repeated calls
    on a static graph, hoist prepare_adjacency() and call gcn_forward_padded
    directly (as done in __main__)."""
    n = x.shape[0]
    tm, tk, n_pad = _pick_tiles(n, tm_target, tk_target)
    a_pad = prepare_adjacency(a_hat, n_pad)
    x_pad = _pad2(x, n_pad, _round_up(x.shape[1], 128)).astype(jnp.bfloat16)
    out_pad = gcn_forward_padded(params, x_pad, a_pad,
                                 log_soft_max_last_layer=log_soft_max_last_layer,
                                 tm=tm, tk=tk)
    c_out = params["convs"][-1]["w"].shape[1]
    return out_pad[:n, :c_out]


# ----------------------------------------------------------------------------
# Reference (plain JAX, f32) for sanity check
# ----------------------------------------------------------------------------
def gcn_forward_ref(params, x, a_hat, log_soft_max_last_layer=True):
    eps = 1e-5
    n_layers = len(params["convs"])
    for i in range(n_layers - 1):
        conv = params["convs"][i]
        bn = params["bns"][i]
        h = a_hat @ (x @ conv["w"]) + conv["b"]
        h = (h - bn["mean"]) / jnp.sqrt(bn["var"] + eps) * bn["gamma"] + bn["beta"]
        x = jnp.maximum(h, 0.0)
    conv = params["convs"][-1]
    h = a_hat @ (x @ conv["w"]) + conv["b"]
    return jax.nn.log_softmax(h, axis=-1) if log_soft_max_last_layer else h


if __name__ == "__main__":
    key = jax.random.PRNGKey(0)
    k_x, k_a, k_p = jax.random.split(key, 3)

    # Small graph: 200 nodes (exercises N-padding and tile clamping),
    # 32 in features, 64 hidden, 16 classes, 3 layers.
    N, C_IN, C_HID, C_OUT, LAYERS = 200, 32, 64, 16, 3

    x = jax.random.normal(k_x, (N, C_IN), jnp.float32)
    a_rand = jax.random.uniform(k_a, (N, N)) < 0.05
    adj = jnp.asarray(a_rand | a_rand.T, jnp.float32)
    a_hat = gcn_norm_dense(adj)

    params = init_gcn_params(k_p, C_IN, C_HID, C_OUT, LAYERS)

    # Hoisted, reusable preprocessing (graph is static across calls).
    tm, tk, n_pad = _pick_tiles(N)
    a_pad = prepare_adjacency(a_hat, n_pad)
    x_pad = _pad2(x, n_pad, _round_up(C_IN, 128)).astype(jnp.bfloat16)

    out_pad = gcn_forward_padded(params, x_pad, a_pad,
                                 log_soft_max_last_layer=True, tm=tm, tk=tk)
    out = jax.block_until_ready(out_pad)[:N, :C_OUT]

    ref = gcn_forward_ref(params, x, a_hat, log_soft_max_last_layer=True)
    assert out.shape == (N, C_OUT), out.shape
    # bf16 operands (f32 accumulation) -> loosened tolerance vs f32 reference.
    assert jnp.allclose(out, ref, atol=2e-2, rtol=2e-2), (
        float(jnp.max(jnp.abs(out - ref))))
    # log_softmax rows should (exp-)sum to 1 (computed consistently in f32).
    assert jnp.allclose(jnp.sum(jnp.exp(out), axis=-1), 1.0, atol=1e-3)

    # Also exercise the plain (no log_softmax, no ReLU) last-layer path,
    # reusing the hoisted a_pad / x_pad.
    out_plain_pad = jax.block_until_ready(
        gcn_forward_padded(params, x_pad, a_pad,
                           log_soft_max_last_layer=False, tm=tm, tk=tk))
    out_plain = out_plain_pad[:N, :C_OUT]
    ref_plain = gcn_forward_ref(params, x, a_hat, log_soft_max_last_layer=False)
    assert jnp.allclose(out_plain, ref_plain, atol=2e-2, rtol=2e-2)

    print("KERNEL_OK")
</pallas_src>

<mosaic_0001>
module attributes {stable_mosaic.version = 11 : i64} {
  func.func @_xw_kernel(%arg0: i32, %arg1: memref<128x128xbf16, #tpu.memory_space<vmem>>, %arg2: memref<128x128xbf16, #tpu.memory_space<vmem>>, %arg3: memref<128x128xbf16, #tpu.memory_space<vmem>>) attributes {dimension_semantics = [#tpu.dimension_semantics<parallel>], iteration_bounds = array<i64: 2>, scalar_prefetch = 0 : i64, scratch_operands = 0 : i64, tpu.core_type = #tpu.core_type<tc>, window_params = [{transform_indices = @transform_0, window_bounds = array<i64: 128, 128>}, {pipeline_mode = #tpu.pipeline_mode<synchronous>, transform_indices = @transform_1, window_bounds = array<i64: 128, 128>}, {transform_indices = @transform_2, window_bounds = array<i64: 128, 128>}]} {
    %c0 = arith.constant 0 : index
    %c0_0 = arith.constant 0 : index
    %0 = vector.load %arg1[%c0, %c0_0] : memref<128x128xbf16, #tpu.memory_space<vmem>>, vector<128x128xbf16>
    %c0_1 = arith.constant 0 : index
    %c0_2 = arith.constant 0 : index
    %1 = vector.load %arg2[%c0_1, %c0_2] : memref<128x128xbf16, #tpu.memory_space<vmem>>, vector<128x128xbf16>
    %cst = arith.constant dense<0.000000e+00> : vector<128x128xf32>
    %2 = tpu.matmul %0, %1, %cst {dimension_numbers = #tpu.dot_dimension_numbers<[1], [0], [0], [1], [0, 0, 1, 1], [], []>} : vector<128x128xbf16>, vector<128x128xbf16>, vector<128x128xf32> -> vector<128x128xf32>
    %3 = arith.truncf %2 : vector<128x128xf32> to vector<128x128xbf16>
    %c0_3 = arith.constant 0 : index
    %c0_4 = arith.constant 0 : index
    %4 = vector.load %arg3[%c0_3, %c0_4] : memref<128x128xbf16, #tpu.memory_space<vmem>>, vector<128x128xbf16>
    tpu.vector_store %arg3[%c0_3, %c0_4], %3 {strides = array<i32>} : memref<128x128xbf16, #tpu.memory_space<vmem>>, vector<128x128xbf16>,
    return
  }
  func.func @transform_0(%arg0: i32) -> (i32, i32) {
    %c0_i32 = arith.constant 0 : i32
    %c0_i32_0 = arith.constant 0 : i32
    return %arg0, %c0_i32 : i32, i32
  }
  func.func @transform_1(%arg0: i32) -> (i32, i32) {
    %c0_i32 = arith.constant 0 : i32
    %c0_i32_0 = arith.constant 0 : i32
    %c0_i32_1 = arith.constant 0 : i32
    return %c0_i32, %c0_i32_0 : i32, i32
  }
  func.func @transform_2(%arg0: i32) -> (i32, i32) {
    %c0_i32 = arith.constant 0 : i32
    %c0_i32_0 = arith.constant 0 : i32
    return %arg0, %c0_i32 : i32, i32
  }
}

module attributes {stable_mosaic.version = 11 : i64} {
  func.func @_agg_hidden_kernel(%arg0: i32, %arg1: i32, %arg2: memref<128x256xbf16, #tpu.memory_space<vmem>>, %arg3: memref<256x128xbf16, #tpu.memory_space<vmem>>, %arg4: memref<1x128xf32, #tpu.memory_space<vmem>>, %arg5: memref<128x128xbf16, #tpu.memory_space<vmem>>, %arg6: memref<128x128xf32, #tpu.memory_space<vmem>>) attributes {dimension_semantics = [#tpu.dimension_semantics<parallel>, #tpu.dimension_semantics<arbitrary>], iteration_bounds = array<i64: 2, 1>, scalar_prefetch = 0 : i64, scratch_operands = 1 : i64, tpu.core_type = #tpu.core_type<tc>, window_params = [{transform_indices = @transform_0, window_bounds = array<i64: 128, 256>}, {pipeline_mode = #tpu.pipeline_mode<synchronous>, transform_indices = @transform_1, window_bounds = array<i64: 256, 128>}, {pipeline_mode = #tpu.pipeline_mode<synchronous>, transform_indices = @transform_2, window_bounds = array<i64: 1, 128>}, {transform_indices = @transform_3, window_bounds = array<i64: 128, 128>}]} {
    %c0_i32 = arith.constant 0 : i32
    %0 = arith.cmpi eq, %arg1, %c0_i32 : i32
    %1 = arith.extui %0 : i1 to i32
    %c0_i32_0 = arith.constant 0 : i32
    %2 = arith.cmpi ne, %1, %c0_i32_0 : i32
    scf.if %2 {
      %c0_9 = arith.constant 0 : index
      %c0_10 = arith.constant 0 : index
      %15 = vector.load %arg4[%c0_9, %c0_10] : memref<1x128xf32, #tpu.memory_space<vmem>>, vector<1x128xf32>
      %16 = vector.shape_cast %15 : vector<1x128xf32> to vector<1x128xf32>
      %17 = vector.broadcast %16 : vector<1x128xf32> to vector<128x128xf32>
      %c0_11 = arith.constant 0 : index
      %c0_12 = arith.constant 0 : index
      %18 = vector.load %arg6[%c0_11, %c0_12] : memref<128x128xf32, #tpu.memory_space<vmem>>, vector<128x128xf32>
      tpu.vector_store %arg6[%c0_11, %c0_12], %17 {strides = array<i32>} : memref<128x128xf32, #tpu.memory_space<vmem>>, vector<128x128xf32>,
    } else {
    }
    %c256_i32 = arith.constant 256 : i32
    %3 = arith.muli %arg1, %c256_i32 : i32
    %4 = tpu.assume_multiple %3, 256 : i32
    %5 = arith.index_cast %4 : i32 to index
    %c0 = arith.constant 0 : index
    %6 = vector.load %arg3[%5, %c0] : memref<256x128xbf16, #tpu.memory_space<vmem>>, vector<256x128xbf16>
    %c0_1 = arith.constant 0 : index
    %c0_2 = arith.constant 0 : index
    %7 = vector.load %arg6[%c0_1, %c0_2] : memref<128x128xf32, #tpu.memory_space<vmem>>, vector<128x128xf32>
    %c0_3 = arith.constant 0 : index
    %c0_4 = arith.constant 0 : index
    %8 = vector.load %arg2[%c0_3, %c0_4] : memref<128x256xbf16, #tpu.memory_space<vmem>>, vector<128x256xbf16>
    %cst = arith.constant dense<0.000000e+00> : vector<128x128xf32>
    %9 = tpu.matmul %8, %6, %cst {dimension_numbers = #tpu.dot_dimension_numbers<[1], [0], [0], [1], [0, 0, 1, 1], [], []>} : vector<128x256xbf16>, vector<256x128xbf16>, vector<128x128xf32> -> vector<128x128xf32>
    %10 = arith.addf %7, %9 : vector<128x128xf32>
    %c0_5 = arith.constant 0 : index
    %c0_6 = arith.constant 0 : index
    %11 = vector.load %arg6[%c0_5, %c0_6] : memref<128x128xf32, #tpu.memory_space<vmem>>, vector<128x128xf32>
    tpu.vector_store %arg6[%c0_5, %c0_6], %10 {strides = array<i32>} : memref<128x128xf32, #tpu.memory_space<vmem>>, vector<128x128xf32>,
    %c0_i32_7 = arith.constant 0 : i32
    %12 = arith.cmpi eq, %arg1, %c0_i32_7 : i32
    %13 = arith.extui %12 : i1 to i32
    %c0_i32_8 = arith.constant 0 : i32
    %14 = arith.cmpi ne, %13, %c0_i32_8 : i32
    scf.if %14 {
      %c0_9 = arith.constant 0 : index
      %c0_10 = arith.constant 0 : index
      %15 = vector.load %arg6[%c0_9, %c0_10] : memref<128x128xf32, #tpu.memory_space<vmem>>, vector<128x128xf32>
      %cst_11 = arith.constant 0.000000e+00 : f32
      %16 = vector.broadcast %cst_11 : f32 to vector<128x128xf32>
      %17 = arith.maximumf %15, %16 : vector<128x128xf32>
      %18 = arith.truncf %17 : vector<128x128xf32> to vector<128x128xbf16>
      %c0_12 = arith.constant 0 : index
      %c0_13 = arith.constant 0 : index
      %19 = vector.load %arg5[%c0_12, %c0_13] : memref<128x128xbf16, #tpu.memory_space<vmem>>, vector<128x128xbf16>
      tpu.vector_store %arg5[%c0_12, %c0_13], %18 {strides = array<i32>} : memref<128x128xbf16, #tpu.memory_space<vmem>>, vector<128x128xbf16>,
    } else {
    }
    return
  }
  func.func @transform_0(%arg0: i32, %arg1: i32) -> (i32, i32) {
    %c0_i32 = arith.constant 0 : i32
    return %arg0, %arg1 : i32, i32
  }
  func.func @transform_1(%arg0: i32, %arg1: i32) -> (i32, i32) {
    %c0_i32 = arith.constant 0 : i32
    %c0_i32_0 = arith.constant 0 : i32
    %c0_i32_1 = arith.constant 0 : i32
    return %c0_i32, %c0_i32_0 : i32, i32
  }
  func.func @transform_2(%arg0: i32, %arg1: i32) -> (i32, i32) {
    %c0_i32 = arith.constant 0 : i32
    %c0_i32_0 = arith.constant 0 : i32
    %c0_i32_1 = arith.constant 0 : i32
    return %c0_i32, %c0_i32_0 : i32, i32
  }
  func.func @transform_3(%arg0: i32, %arg1: i32) -> (i32, i32) {
    %c0_i32 = arith.constant 0 : i32
    %c0_i32_0 = arith.constant 0 : i32
    return %arg0, %c0_i32 : i32, i32
  }
}

module attributes {stable_mosaic.version = 11 : i64} {
  func.func @_agg_final_kernel(%arg0: i32, %arg1: i32, %arg2: memref<128x256xbf16, #tpu.memory_space<vmem>>, %arg3: memref<256x128xbf16, #tpu.memory_space<vmem>>, %arg4: memref<1x128xf32, #tpu.memory_space<vmem>>, %arg5: memref<128x128xf32, #tpu.memory_space<vmem>>) attributes {dimension_semantics = [#tpu.dimension_semantics<parallel>, #tpu.dimension_semantics<arbitrary>], iteration_bounds = array<i64: 2, 1>, scalar_prefetch = 0 : i64, scratch_operands = 0 : i64, tpu.core_type = #tpu.core_type<tc>, window_params = [{transform_indices = @transform_0, window_bounds = array<i64: 128, 256>}, {pipeline_mode = #tpu.pipeline_mode<synchronous>, transform_indices = @transform_1, window_bounds = array<i64: 256, 128>}, {pipeline_mode = #tpu.pipeline_mode<synchronous>, transform_indices = @transform_2, window_bounds = array<i64: 1, 128>}, {transform_indices = @transform_3, window_bounds = array<i64: 128, 128>}]} {
    %c0_i32 = arith.constant 0 : i32
    %0 = arith.cmpi eq, %arg1, %c0_i32 : i32
    %1 = arith.extui %0 : i1 to i32
    %c0_i32_0 = arith.constant 0 : i32
    %2 = arith.cmpi ne, %1, %c0_i32_0 : i32
    scf.if %2 {
      %c0_9 = arith.constant 0 : index
      %c0_10 = arith.constant 0 : index
      %15 = vector.load %arg4[%c0_9, %c0_10] : memref<1x128xf32, #tpu.memory_space<vmem>>, vector<1x128xf32>
      %16 = vector.shape_cast %15 : vector<1x128xf32> to vector<1x128xf32>
      %17 = vector.broadcast %16 : vector<1x128xf32> to vector<128x128xf32>
      %c0_11 = arith.constant 0 : index
      %c0_12 = arith.constant 0 : index
      %18 = vector.load %arg5[%c0_11, %c0_12] : memref<128x128xf32, #tpu.memory_space<vmem>>, vector<128x128xf32>
      tpu.vector_store %arg5[%c0_11, %c0_12], %17 {strides = array<i32>} : memref<128x128xf32, #tpu.memory_space<vmem>>, vector<128x128xf32>,
    } else {
    }
    %c256_i32 = arith.constant 256 : i32
    %3 = arith.muli %arg1, %c256_i32 : i32
    %4 = tpu.assume_multiple %3, 256 : i32
    %5 = arith.index_cast %4 : i32 to index
    %c0 = arith.constant 0 : index
    %6 = vector.load %arg3[%5, %c0] : memref<256x128xbf16, #tpu.memory_space<vmem>>, vector<256x128xbf16>
    %c0_1 = arith.constant 0 : index
    %c0_2 = arith.constant 0 : index
    %7 = vector.load %arg5[%c0_1, %c0_2] : memref<128x128xf32, #tpu.memory_space<vmem>>, vector<128x128xf32>
    %c0_3 = arith.constant 0 : index
    %c0_4 = arith.constant 0 : index
    %8 = vector.load %arg2[%c0_3, %c0_4] : memref<128x256xbf16, #tpu.memory_space<vmem>>, vector<128x256xbf16>
    %cst = arith.constant dense<0.000000e+00> : vector<128x128xf32>
    %9 = tpu.matmul %8, %6, %cst {dimension_numbers = #tpu.dot_dimension_numbers<[1], [0], [0], [1], [0, 0, 1, 1], [], []>} : vector<128x256xbf16>, vector<256x128xbf16>, vector<128x128xf32> -> vector<128x128xf32>
    %10 = arith.addf %7, %9 : vector<128x128xf32>
    %c0_5 = arith.constant 0 : index
    %c0_6 = arith.constant 0 : index
    %11 = vector.load %arg5[%c0_5, %c0_6] : memref<128x128xf32, #tpu.memory_space<vmem>>, vector<128x128xf32>
    tpu.vector_store %arg5[%c0_5, %c0_6], %10 {strides = array<i32>} : memref<128x128xf32, #tpu.memory_space<vmem>>, vector<128x128xf32>,
    %c0_i32_7 = arith.constant 0 : i32
    %12 = arith.cmpi eq, %arg1, %c0_i32_7 : i32
    %13 = arith.extui %12 : i1 to i32
    %c0_i32_8 = arith.constant 0 : i32
    %14 = arith.cmpi ne, %13, %c0_i32_8 : i32
    scf.if %14 {
      %c0_9 = arith.constant 0 : index
      %c0_10 = arith.constant 0 : index
      %15 = vector.load %arg5[%c0_9, %c0_10] : memref<128x128xf32, #tpu.memory_space<vmem>>, vector<128x128xf32>
      %16 = tpu.iota {dimensions = array<i32: 1>} : vector<128x128xi32>
      %c16_i32 = arith.constant 16 : i32
      %17 = vector.broadcast %c16_i32 : i32 to vector<128x128xi32>
      %18 = arith.cmpi slt, %16, %17 : vector<128x128xi32>
      %cst_11 = arith.constant 0xFF800000 : f32
      %19 = vector.broadcast %cst_11 : f32 to vector<128x128xf32>
      %20 = arith.select %18, %15, %19 : vector<128x128xi1>, vector<128x128xf32>
      %cst_12 = arith.constant dense<0xFF800000> : vector<128xf32>
      %21 = vector.multi_reduction <maximumf>, %20, %cst_12 [1] : vector<128x128xf32> to vector<128xf32>
      %22 = vector.shape_cast %21 : vector<128xf32> to vector<128x1xf32>
      %23 = vector.broadcast %22 : vector<128x1xf32> to vector<128x128xf32>
      %24 = arith.subf %20, %23 : vector<128x128xf32>
      %25 = math.exp %24 : vector<128x128xf32>
      %cst_13 = arith.constant dense<0.000000e+00> : vector<128xf32>
      %26 = vector.multi_reduction <add>, %25, %cst_13 [1] : vector<128x128xf32> to vector<128xf32>
      %27 = vector.shape_cast %26 : vector<128xf32> to vector<128x1xf32>
      %28 = math.log %27 : vector<128x1xf32>
      %29 = vector.broadcast %28 : vector<128x1xf32> to vector<128x128xf32>
      %30 = arith.subf %24, %29 : vector<128x128xf32>
      %c0_14 = arith.constant 0 : index
      %c0_15 = arith.constant 0 : index
      %31 = vector.load %arg5[%c0_14, %c0_15] : memref<128x128xf32, #tpu.memory_space<vmem>>, vector<128x128xf32>
      tpu.vector_store %arg5[%c0_14, %c0_15], %30 {strides = array<i32>} : memref<128x128xf32, #tpu.memory_space<vmem>>, vector<128x128xf32>,
    } else {
    }
    return
  }
  func.func @transform_0(%arg0: i32, %arg1: i32) -> (i32, i32) {
    %c0_i32 = arith.constant 0 : i32
    return %arg0, %arg1 : i32, i32
  }
  func.func @transform_1(%arg0: i32, %arg1: i32) -> (i32, i32) {
    %c0_i32 = arith.constant 0 : i32
    %c0_i32_0 = arith.constant 0 : i32
    %c0_i32_1 = arith.constant 0 : i32
    return %c0_i32, %c0_i32_0 : i32, i32
  }
  func.func @transform_2(%arg0: i32, %arg1: i32) -> (i32, i32) {
    %c0_i32 = arith.constant 0 : i32
    %c0_i32_0 = arith.constant 0 : i32
    %c0_i32_1 = arith.constant 0 : i32
    return %c0_i32, %c0_i32_0 : i32, i32
  }
  func.func @transform_3(%arg0: i32, %arg1: i32) -> (i32, i32) {
    %c0_i32 = arith.constant 0 : i32
    %c0_i32_0 = arith.constant 0 : i32
    return %arg0, %c0_i32 : i32, i32
  }
}

</mosaic_0001>

<llo_original>
// kernel: gcn_forward_padded.6
$region0: #{gcn_forward_padded.6}
  #allocation0 [shape = 'u32[]', space=smem, size = 0x4, offset = 0x4, fixed_abs, tag = 'smem constant byte address 0x4 - core index']
  #allocation1 [shape = 'u32[144,128]{1,0:T(1,128)}', space=vmem, size = 0x12000, scoped, tag = 'internal scratch']
  %s0 = inlined_call_operand.vmem [shape: bf16[256,128], index: 0, kind: input, shape index: {}]
  %s1 = inlined_call_operand.vmem [shape: bf16[128,128], index: 1, kind: input, shape index: {}]
  %s2 = inlined_call_operand.vmem [shape: bf16[256,128], index: 2, kind: output, shape index: {}]
  %s3 = sld [smem:[#allocation0]]
  $region41: #{gcn_forward_padded.6} parent=0
    _
  %s5 = ssub.s32 1, %s3
  %s6 = scalar_select 0, %s5, %s3
  loop: start=0, step=1, limit=4
  $region2: #{gcn_forward_padded.6} parent=0 // loop_pre_header
    _
  $region3: #{gcn_forward_padded.6} parent=0 // loop_header
    %s8 = sphi 0, %s12
    %p9 = scmp.ge.s32.totalorder %s8, 4
    %s18 = sphi 0, %s20
    %s21 = sphi 0, %s18
    %s22 = sphi 0, %s21
    %s38 = sphi 0, %s22
    %s42 = sphi 0, %s42
    %s44 = sphi 0, %s42
    %s45 = sphi 0, %s44
    %s59 = sphi 0, %s45
    %s65 = sphi 0, %s67
    %s68 = sphi 0, %s65
    %s69 = sphi 0, %s68
    %s85 = sphi 0, %s69
  $region4: #{gcn_forward_padded.6} parent=0 // loop_header_branch
    %11 = sbr.rel (%p9) target = $region8
  $region5: #{gcn_forward_padded.6} parent=0 // loop_body
    %s13 = ssub.s32 %s8, 1
    %s14 = ssub.s32 %s8, 2
    %s15 = sadd.s32 %s8, 1
    %s16 = ssub.s32 %s8, %s15
    %p17 = scmp.eq.s32.totalorder %s16, 0
    %s19 = sadd.s32 %s18, 1
    %s20 = scalar_select %p17, %s18, %s19
    %p23 = pneg %p17
    %p24 = scmp.eq.s32.totalorder %s8, 1
    %p25 = por %p23, %p24
    %p26 = scmp.ne.s32.totalorder %s18, %s21
    %p27 = scmp.eq.s32.totalorder %s8, 0
    %p28 = por %p26, %p27
    %p29 = scmp.ne.s32.totalorder %s18, %s21
    %p30 = scmp.eq.s32.totalorder %s13, 1
    %p31 = por %p29, %p30
    %p32 = scmp.ne.s32.totalorder %s21, %s22
    %p33 = scmp.eq.s32.totalorder %s13, 0
    %p34 = por %p32, %p33
    %p35 = scmp.ne.s32.totalorder %s21, %s22
    %p36 = scmp.eq.s32.totalorder %s14, 1
    %p37 = por %p35, %p36
    %p39 = scmp.ne.s32.totalorder %s22, %s38
    %p40 = scmp.eq.s32.totalorder %s14, 0
    %p41 = por %p39, %p40
    %s43 = sadd.s32 %s42, 1
    %p46 = scmp.eq.s32.totalorder %s8, 1
    %p47 = scmp.ne.s32.totalorder %s42, %s44
    %p48 = scmp.eq.s32.totalorder %s8, 0
    %p49 = por %p47, %p48
    %p50 = scmp.ne.s32.totalorder %s42, %s44
    %p51 = scmp.eq.s32.totalorder %s13, 1
    %p52 = por %p50, %p51
    %p53 = scmp.ne.s32.totalorder %s44, %s45
    %p54 = scmp.eq.s32.totalorder %s13, 0
    %p55 = por %p53, %p54
    %p56 = scmp.ne.s32.totalorder %s44, %s45
    %p57 = scmp.eq.s32.totalorder %s14, 1
    %p58 = por %p56, %p57
    %p60 = scmp.ne.s32.totalorder %s45, %s59
    %p61 = scmp.eq.s32.totalorder %s14, 0
    %p62 = por %p60, %p61
    %s63 = ssub.s32 %s8, %s15
    %p64 = scmp.eq.s32.totalorder %s63, 0
    %s66 = sadd.s32 %s65, 1
    %s67 = scalar_select %p64, %s65, %s66
    %p70 = pneg %p64
    %p71 = scmp.eq.s32.totalorder %s8, 1
    %p72 = por %p70, %p71
    %p73 = scmp.ne.s32.totalorder %s65, %s68
    %p74 = scmp.eq.s32.totalorder %s8, 0
    %p75 = por %p73, %p74
    %p76 = scmp.ne.s32.totalorder %s65, %s68
    %p77 = scmp.eq.s32.totalorder %s13, 1
    %p78 = por %p76, %p77
    %p79 = scmp.ne.s32.totalorder %s68, %s69
    %p80 = scmp.eq.s32.totalorder %s13, 0
    %p81 = por %p79, %p80
    %p82 = scmp.ne.s32.totalorder %s68, %s69
    %p83 = scmp.eq.s32.totalorder %s14, 1
    %p84 = por %p82, %p83
    %p86 = scmp.ne.s32.totalorder %s69, %s85
    %p87 = scmp.eq.s32.totalorder %s14, 0
    %p88 = por %p86, %p87
    %p89 = scmp.le.s32.totalorder 1, %s8
    %p90 = scmp.lt.s32.totalorder %s8, 3
    %p91 = pnand %p89, %p90
    %p92 = pneg %p91
    // Predicated region
    $region9: #{gcn_forward_padded.6} parent=5 // pred_check
      _
    $region10: #{gcn_forward_padded.6} parent=5 // pred_check_branch
      %94 = sbr.rel (%p91) target = $region12
    $region11: #{gcn_forward_padded.6} parent=5 // pred_region
      %s95 = ssub.s32 %s8, 1
      // Predicated region
      $region13: #{gcn_forward_padded.6} parent=11 // pred_check
        %p96 = pneg %p55
      $region14: #{gcn_forward_padded.6} parent=11 // pred_check_branch
        %98 = sbr.rel (%p96) target = $region16
      $region15: #{gcn_forward_padded.6} parent=11 // pred_region
        _
      $region16: #{gcn_forward_padded.6} parent=11 // pred_fallthru
        _
    $region12: #{gcn_forward_padded.6} parent=5 // pred_fallthru
      _
    %p99 = scmp.lt.s32.totalorder %s8, 2
    // Predicated region
    $region17: #{gcn_forward_padded.6} parent=5 // pred_check
      %p100 = pneg %p99
    $region18: #{gcn_forward_padded.6} parent=5 // pred_check_branch
      %102 = sbr.rel (%p100) target = $region20
    $region19: #{gcn_forward_padded.6} parent=5 // pred_region
      // Predicated region
      $region21: #{gcn_forward_padded.6} parent=19 // pred_check
        %p103 = pneg %p28
      $region22: #{gcn_forward_padded.6} parent=19 // pred_check_branch
        %105 = sbr.rel (%p103) target = $region24
      $region23: #{gcn_forward_padded.6} parent=19 // pred_region
        %s106 = smul.u32 16, %s8
        %p107 = scmp.lt.s32.totalorder %s106, 31
        %s108 = scalar_select %p107, %s106, 31
        %s109 = smul.addr %s108, 4
        %s110 = scalar_lea.vmem %s0, %s109
        %s111 = smul.u32 16, %s8
      $region24: #{gcn_forward_padded.6} parent=19 // pred_fallthru
        _
    $region20: #{gcn_forward_padded.6} parent=5 // pred_fallthru
      _
    %p112 = scmp.le.s32.totalorder 1, %s8
    %p113 = scmp.lt.s32.totalorder %s8, 3
    %p114 = pnand %p112, %p113
    %p115 = pneg %p114
    // Predicated region
    $region25: #{gcn_forward_padded.6} parent=5 // pred_check
      _
    $region26: #{gcn_forward_padded.6} parent=5 // pred_check_branch
      %117 = sbr.rel (%p114) target = $region28
    $region27: #{gcn_forward_padded.6} parent=5 // pred_region
      %s118 = ssub.s32 %s8, 1
      %s119 = smul.u32 16, %s13
      %p120 = scmp.lt.s32.totalorder %s119, 31
      %s121 = scalar_select %p120, %s119, 31
      %s122 = smul.addr %s121, 4
      %s123 = scalar_lea.vmem %s0, %s122
      %p124 = pneg %p34
      %p125 = pneg %p31
      %p126 = pneg %p55
      %p127 = pneg %p52
      %p128 = pneg %p81
      %p129 = pneg %p78
      %s130 = smul.u32 16, %s13
      %p131 = scmp.lt.s32.totalorder %s130, 31
      %s132 = scalar_select %p131, %s130, 31
      %s133 = smul.addr %s132, 4
      %s134 = scalar_lea.vmem %s2, %s133
      %s135 = smul.u32 16, %s13
      %p136 = scmp.lt.s32.totalorder %s135, 31
      %s137 = scalar_select %p136, %s135, 31
      %s138 = smul.addr %s137, 4
      %s139 = scalar_lea.vmem %s0, %s138
      %s140 = smul.u32 16, %s13
      %s141 = smul.u32 16, %s13
      %p142 = scmp.lt.s32.totalorder %s141, 31
      %s143 = scalar_select %p142, %s141, 31
      %s144 = smul.addr %s143, 4
      %s145 = scalar_lea.vmem %s2, %s144
      %s146 = smul.u32 16, %s13
      %v148 = vld [vmem:[%s139] sm:$0xf]
      %v149 = vld [vmem:[%s139 + $0x4] sm:$0xf]
      %v150 = vld [vmem:[%s139 + $0x8] sm:$0xf]
      %v151 = vld [vmem:[%s139 + $0xc] sm:$0xf]
      %v152 = vld [vmem:[%s139 + $0x10] sm:$0xf]
      %v153 = vld [vmem:[%s139 + $0x14] sm:$0xf]
      %v154 = vld [vmem:[%s139 + $0x18] sm:$0xf]
      %v155 = vld [vmem:[%s139 + $0x1c] sm:$0xf]
      %v156 = vld [vmem:[%s139 + $0x20] sm:$0xf]
      %v157 = vld [vmem:[%s139 + $0x24] sm:$0xf]
      %v158 = vld [vmem:[%s139 + $0x28] sm:$0xf]
      %v159 = vld [vmem:[%s139 + $0x2c] sm:$0xf]
      %v160 = vld [vmem:[%s139 + $0x30] sm:$0xf]
      %v161 = vld [vmem:[%s139 + $0x34] sm:$0xf]
      %v162 = vld [vmem:[%s139 + $0x38] sm:$0xf]
      %v163 = vld [vmem:[%s139 + $0x3c] sm:$0xf]
      %v164 = vld [vmem:[%s1] sm:$0xf]
      %v165 = vld [vmem:[%s1 + $0x4] sm:$0xf]
      %v166 = vld [vmem:[%s1 + $0x8] sm:$0xf]
      %v167 = vld [vmem:[%s1 + $0xc] sm:$0xf]
      %v168 = vld [vmem:[%s1 + $0x10] sm:$0xf]
      %v169 = vld [vmem:[%s1 + $0x14] sm:$0xf]
      %v170 = vld [vmem:[%s1 + $0x18] sm:$0xf]
      %v171 = vld [vmem:[%s1 + $0x1c] sm:$0xf]
      %v172 = vld [vmem:[%s1 + $0x20] sm:$0xf]
      %v173 = vld [vmem:[%s1 + $0x24] sm:$0xf]
      %v174 = vld [vmem:[%s1 + $0x28] sm:$0xf]
      %v175 = vld [vmem:[%s1 + $0x2c] sm:$0xf]
      %v176 = vld [vmem:[%s1 + $0x30] sm:$0xf]
      %v177 = vld [vmem:[%s1 + $0x34] sm:$0xf]
      %v178 = vld [vmem:[%s1 + $0x38] sm:$0xf]
      %v179 = vld [vmem:[%s1 + $0x3c] sm:$0xf]
      %v196 = vunpack.c.l.b16 %v148
      %v197 = vunpack.c.l.b16 %v149
      %v198 = vunpack.c.l.b16 %v150
      %v199 = vunpack.c.l.b16 %v151
      %v200 = vunpack.c.l.b16 %v152
      %v201 = vunpack.c.l.b16 %v153
      %v202 = vunpack.c.l.b16 %v154
      %v203 = vunpack.c.l.b16 %v155
      %v204 = vunpack.c.l.b16 %v156
      %v205 = vunpack.c.l.b16 %v157
      %v206 = vunpack.c.l.b16 %v158
      %v207 = vunpack.c.l.b16 %v159
      %v208 = vunpack.c.l.b16 %v160
      %v209 = vunpack.c.l.b16 %v161
      %v210 = vunpack.c.l.b16 %v162
      %v211 = vunpack.c.l.b16 %v163
      %v212 = vpack.c.b16 %v197, %v196
      %v213 = vpack.c.b16 %v199, %v198
      %v214 = vpack.c.b16 %v201, %v200
      %v215 = vpack.c.b16 %v203, %v202
      %v216 = vpack.c.b16 %v205, %v204
      %v217 = vpack.c.b16 %v207, %v206
      %v218 = vpack.c.b16 %v209, %v208
      %v219 = vpack.c.b16 %v211, %v210
      %v244 = vunpack.c.l.b16 %v164
      %v245 = vunpack.c.l.b16 %v165
      %v246 = vunpack.c.l.b16 %v166
      %v247 = vunpack.c.l.b16 %v167
      %v248 = vunpack.c.l.b16 %v168
      %v249 = vunpack.c.l.b16 %v169
      %v250 = vunpack.c.l.b16 %v170
      %v251 = vunpack.c.l.b16 %v171
      %v252 = vunpack.c.l.b16 %v172
      %v253 = vunpack.c.l.b16 %v173
      %v254 = vunpack.c.l.b16 %v174
      %v255 = vunpack.c.l.b16 %v175
      %v256 = vunpack.c.l.b16 %v176
      %v257 = vunpack.c.l.b16 %v177
      %v258 = vunpack.c.l.b16 %v178
      %v259 = vunpack.c.l.b16 %v179
      %v260 = vpack.c.b16 %v245, %v244
      %v261 = vpack.c.b16 %v247, %v246
      %v262 = vpack.c.b16 %v249, %v248
      %v263 = vpack.c.b16 %v251, %v250
      %v264 = vpack.c.b16 %v253, %v252
      %v265 = vpack.c.b16 %v255, %v254
      %v266 = vpack.c.b16 %v257, %v256
      %v267 = vpack.c.b16 %v259, %v258
      %276 = vmatprep.subr.bf16.mxu0 0
      %277 = vmatpush1.bf16.msra.mxu0 %v260
      %278 = vmatprep.subr.bf16.mxu0 0
      %279 = vmatpush1.bf16.msra.mxu0 %v261
      %280 = vmatprep.subr.bf16.mxu0 0
      %281 = vmatpush1.bf16.msra.mxu0 %v262
      %282 = vmatprep.subr.bf16.mxu0 0
      %283 = vmatpush1.bf16.msra.mxu0 %v263
      %284 = vmatprep.subr.bf16.mxu0 0
      %285 = vmatpush1.bf16.msra.mxu0 %v264
      %286 = vmatprep.subr.bf16.mxu0 0
      %287 = vmatpush1.bf16.msra.mxu0 %v265
      %288 = vmatprep.subr.bf16.mxu0 0
      %289 = vmatpush1.bf16.msra.mxu0 %v266
      %290 = vmatprep.subr.bf16.mxu0 0
      %291 = vmatpush1.bf16.msra.mxu0 %v267
      %292 = vmatprep.subr.bf16.mxu0 0
      %293 = vmatpush1.bf16.msra.mxu0 0
      %294 = vmatprep.subr.bf16.mxu0 0
      %295 = vmatpush1.bf16.msra.mxu0 0
      %296 = vmatprep.subr.bf16.mxu0 0
      %297 = vmatpush1.bf16.msra.mxu0 0
      %298 = vmatprep.subr.bf16.mxu0 0
      %299 = vmatpush1.bf16.msra.mxu0 0
      %300 = vmatprep.subr.bf16.mxu0 0
      %301 = vmatpush1.bf16.msra.mxu0 0
      %302 = vmatprep.subr.bf16.mxu0 0
      %303 = vmatpush1.bf16.msra.mxu0 0
      %304 = vmatprep.subr.bf16.mxu0 0
      %305 = vmatpush1.bf16.msra.mxu0 0
      %306 = vmatprep.subr.bf16.mxu0 0
      %307 = vmatpush1.bf16.msra.mxu0 0
      %308 = vmatprep.mubr.bf16.mxu0 0
      %309 = vmatmul.mubr.bf16.gmra.mrb[0].mxu0 %v212
      %v310 = vpop.f32.mrb[0].mxu0
      %v311 = vadd.f32 0.0, %v310
      %v312 = vpop.f32.mrb[0].mxu0
      %v313 = vpop.f32.mrb[0].mxu0
      %v314 = vadd.f32 0.0, %v313
      %v315 = vpop.f32.mrb[0].mxu0
      %316 = vmatprep.mubr.bf16.mxu0 0
      %317 = vmatmul.mubr.bf16.gmra.mrb[0].mxu0 %v213
      %v318 = vpop.f32.mrb[0].mxu0
      %v319 = vadd.f32 0.0, %v318
      %v320 = vpop.f32.mrb[0].mxu0
      %v321 = vpop.f32.mrb[0].mxu0
      %v322 = vadd.f32 0.0, %v321
      %v323 = vpop.f32.mrb[0].mxu0
      %324 = vmatprep.mubr.bf16.mxu0 0
      %325 = vmatmul.mubr.bf16.gmra.mrb[0].mxu0 %v214
      %v326 = vpop.f32.mrb[0].mxu0
      %v327 = vadd.f32 0.0, %v326
      %v328 = vpop.f32.mrb[0].mxu0
      %v329 = vpop.f32.mrb[0].mxu0
      %v330 = vadd.f32 0.0, %v329
      %v331 = vpop.f32.mrb[0].mxu0
      %332 = vmatprep.mubr.bf16.mxu0 0
      %333 = vmatmul.mubr.bf16.gmra.mrb[0].mxu0 %v215
      %v334 = vpop.f32.mrb[0].mxu0
      %v335 = vadd.f32 0.0, %v334
      %v336 = vpop.f32.mrb[0].mxu0
      %v337 = vpop.f32.mrb[0].mxu0
      %v338 = vadd.f32 0.0, %v337
      %v339 = vpop.f32.mrb[0].mxu0
      %340 = vmatprep.mubr.bf16.mxu0 0
      %341 = vmatmul.mubr.bf16.gmra.mrb[0].mxu0 %v216
      %v342 = vpop.f32.mrb[0].mxu0
      %v343 = vadd.f32 0.0, %v342
      %v344 = vpop.f32.mrb[0].mxu0
      %v345 = vpop.f32.mrb[0].mxu0
      %v346 = vadd.f32 0.0, %v345
      %v347 = vpop.f32.mrb[0].mxu0
      %348 = vmatprep.mubr.bf16.mxu0 0
      %349 = vmatmul.mubr.bf16.gmra.mrb[0].mxu0 %v217
      %v350 = vpop.f32.mrb[0].mxu0
      %v351 = vadd.f32 0.0, %v350
      %v352 = vpop.f32.mrb[0].mxu0
      %v353 = vpop.f32.mrb[0].mxu0
      %v354 = vadd.f32 0.0, %v353
      %v355 = vpop.f32.mrb[0].mxu0
      %356 = vmatprep.mubr.bf16.mxu0 0
      %357 = vmatmul.mubr.bf16.gmra.mrb[0].mxu0 %v218
      %v358 = vpop.f32.mrb[0].mxu0
      %v359 = vadd.f32 0.0, %v358
      %v360 = vpop.f32.mrb[0].mxu0
      %v361 = vpop.f32.mrb[0].mxu0
      %v362 = vadd.f32 0.0, %v361
      %v363 = vpop.f32.mrb[0].mxu0
      %364 = vmatprep.mubr.bf16.mxu0 0
      %365 = vmatmul.mubr.bf16.gmra.mrb[0].mxu0 %v219
      %v366 = vpop.f32.mrb[0].mxu0
      %v367 = vadd.f32 0.0, %v366
      %v368 = vpop.f32.mrb[0].mxu0
      %v369 = vpop.f32.mrb[0].mxu0
      %v370 = vadd.f32 0.0, %v369
      %v371 = vpop.f32.mrb[0].mxu0
      %372 = vdwg.mxu0
      %v373 = vpack.c.bf16 %v314, %v311
      %v374 = vpack.c.bf16 %v322, %v319
      %v375 = vpack.c.bf16 %v330, %v327
      %v376 = vpack.c.bf16 %v338, %v335
      %v377 = vpack.c.bf16 %v346, %v343
      %v378 = vpack.c.bf16 %v354, %v351
      %v379 = vpack.c.bf16 %v362, %v359
      %v380 = vpack.c.bf16 %v370, %v367
      %v389 = vunpack.c.l.b16 %v373
      %v390 = vunpack.c.h.b16 %v373
      %v391 = vunpack.c.l.b16 %v374
      %v392 = vunpack.c.h.b16 %v374
      %v393 = vunpack.c.l.b16 %v375
      %v394 = vunpack.c.h.b16 %v375
      %v395 = vunpack.c.l.b16 %v376
      %v396 = vunpack.c.h.b16 %v376
      %v397 = vunpack.c.l.b16 %v377
      %v398 = vunpack.c.h.b16 %v377
      %v399 = vunpack.c.l.b16 %v378
      %v400 = vunpack.c.h.b16 %v378
      %v401 = vunpack.c.l.b16 %v379
      %v402 = vunpack.c.h.b16 %v379
      %v403 = vunpack.c.l.b16 %v380
      %v404 = vunpack.c.h.b16 %v380
      %v405 = vpack.c.b16 %v389, %v389
      %v406 = vpack.c.b16 %v390, %v390
      %v407 = vpack.c.b16 %v391, %v391
      %v408 = vpack.c.b16 %v392, %v392
      %v409 = vpack.c.b16 %v393, %v393
      %v410 = vpack.c.b16 %v394, %v394
      %v411 = vpack.c.b16 %v395, %v395
      %v412 = vpack.c.b16 %v396, %v396
      %v413 = vpack.c.b16 %v397, %v397
      %v414 = vpack.c.b16 %v398, %v398
      %v415 = vpack.c.b16 %v399, %v399
      %v416 = vpack.c.b16 %v400, %v400
      %v417 = vpack.c.b16 %v401, %v401
      %v418 = vpack.c.b16 %v402, %v402
      %v419 = vpack.c.b16 %v403, %v403
      %v420 = vpack.c.b16 %v404, %v404
      %437 = vst [vmem:[%s145] sm:$0xf] %v405
      %438 = vst [vmem:[%s145 + $0x4] sm:$0xf] %v406
      %439 = vst [vmem:[%s145 + $0x8] sm:$0xf] %v407
      %440 = vst [vmem:[%s145 + $0xc] sm:$0xf] %v408
      %441 = vst [vmem:[%s145 + $0x10] sm:$0xf] %v409
      %442 = vst [vmem:[%s145 + $0x14] sm:$0xf] %v410
      %443 = vst [vmem:[%s145 + $0x18] sm:$0xf] %v411
      %444 = vst [vmem:[%s145 + $0x1c] sm:$0xf] %v412
      %445 = vst [vmem:[%s145 + $0x20] sm:$0xf] %v413
      %446 = vst [vmem:[%s145 + $0x24] sm:$0xf] %v414
      %447 = vst [vmem:[%s145 + $0x28] sm:$0xf] %v415
      %448 = vst [vmem:[%s145 + $0x2c] sm:$0xf] %v416
      %449 = vst [vmem:[%s145 + $0x30] sm:$0xf] %v417
      %450 = vst [vmem:[%s145 + $0x34] sm:$0xf] %v418
      %451 = vst [vmem:[%s145 + $0x38] sm:$0xf] %v419
      %452 = vst [vmem:[%s145 + $0x3c] sm:$0xf] %v420
      %s453 = smul.u32 16, %s13
      %p454 = scmp.lt.s32.totalorder %s453, 31
      %s455 = scalar_select %p454, %s453, 31
      %s456 = smul.addr %s455, 4
      %s457 = scalar_lea.vmem %s2, %s456
      // Predicated region
      $region29: #{gcn_forward_padded.6} parent=27 // pred_check
        %p458 = pneg %p78
      $region30: #{gcn_forward_padded.6} parent=27 // pred_check_branch
        %460 = sbr.rel (%p458) target = $region32
      $region31: #{gcn_forward_padded.6} parent=27 // pred_region
        %s461 = smul.u32 16, %s13
      $region32: #{gcn_forward_padded.6} parent=27 // pred_fallthru
        _
    $region28: #{gcn_forward_padded.6} parent=5 // pred_fallthru
      _
    %p462 = scmp.le.s32.totalorder 2, %s8
    // Predicated region
    $region33: #{gcn_forward_padded.6} parent=5 // pred_check
      %p463 = pneg %p462
    $region34: #{gcn_forward_padded.6} parent=5 // pred_check_branch
      %465 = sbr.rel (%p463) target = $region36
    $region35: #{gcn_forward_padded.6} parent=5 // pred_region
      %s466 = ssub.s32 %s8, 2
      // Predicated region
      $region37: #{gcn_forward_padded.6} parent=35 // pred_check
        %p467 = pneg %p84
      $region38: #{gcn_forward_padded.6} parent=35 // pred_check_branch
        %469 = sbr.rel (%p467) target = $region40
      $region39: #{gcn_forward_padded.6} parent=35 // pred_region
        %s470 = smul.u32 16, %s14
        %p471 = scmp.lt.s32.totalorder %s470, 31
        %s472 = scalar_select %p471, %s470, 31
        %s473 = smul.addr %s472, 4
        %s474 = scalar_lea.vmem %s2, %s473
      $region40: #{gcn_forward_padded.6} parent=35 // pred_fallthru
        _
    $region36: #{gcn_forward_padded.6} parent=5 // pred_fallthru
      _
  $region6: #{gcn_forward_padded.6} parent=0 // loop_footer
    %s12 = sadd.s32 1, %s8
  $region7: #{gcn_forward_padded.6} parent=0 // loop_footer_branch
    %7 = sbr.rel target = $region3
  $region8: #{gcn_forward_padded.6} parent=0 // loop_exit
    _

// kernel: gcn_forward_padded.7
$region0: #{gcn_forward_padded.7}
  #allocation0 [shape = 'u32[]', space=smem, size = 0x4, offset = 0x4, fixed_abs, tag = 'smem constant byte address 0x4 - core index']
  #allocation1 [shape = 'u32[144,128]{1,0:T(1,128)}', space=vmem, size = 0x12000, scoped, tag = 'internal scratch']
  #allocation2 [shape = 'f32[128,128]{1,0:T(8,128)}', space=vmem, size = 0x10000, scoped, tag = 'scratch operand']
  %s0 = inlined_call_operand.vmem [shape: bf16[256,256], index: 0, kind: input, shape index: {}]
  %s1 = inlined_call_operand.vmem [shape: bf16[256,128], index: 1, kind: input, shape index: {}]
  %s2 = inlined_call_operand.vmem [shape: f32[1,128], index: 2, kind: input, shape index: {}]
  %s3 = inlined_call_operand.vmem [shape: bf16[256,128], index: 3, kind: output, shape index: {}]
  %s4 = sld [smem:[#allocation0]]
  $region53: #{gcn_forward_padded.7} parent=0
    _
  %s6 = ssub.s32 1, %s4
  %s7 = scalar_select 0, %s6, %s4
  loop: start=0, step=1, limit=4
  $region2: #{gcn_forward_padded.7} parent=0 // loop_pre_header
    _
  $region3: #{gcn_forward_padded.7} parent=0 // loop_header
    %s9 = sphi 0, %s13
    %p10 = scmp.ge.s32.totalorder %s9, 4
    %s16 = sphi 0, %s28
    %s17 = sphi 0, %s24
    %s18 = sphi 0, %s16
    %s19 = sphi 0, %s17
    %s20 = sphi 0, %s18
    %s21 = sphi 0, %s19
    %s33 = sphi 0, %s35
    %s36 = sphi 0, %s33
    %s37 = sphi 0, %s36
    %s53 = sphi 0, %s37
    %s57 = sphi 0, %s57
    %s59 = sphi 0, %s57
    %s60 = sphi 0, %s59
    %s74 = sphi 0, %s60
    %s78 = sphi 0, %s78
    %s80 = sphi 0, %s78
    %s81 = sphi 0, %s80
    %s95 = sphi 0, %s81
    %s101 = sphi 0, %s103
    %s104 = sphi 0, %s101
    %s105 = sphi 0, %s104
    %s121 = sphi 0, %s105
  $region4: #{gcn_forward_padded.7} parent=0 // loop_header_branch
    %12 = sbr.rel (%p10) target = $region8
  $region5: #{gcn_forward_padded.7} parent=0 // loop_body
    %s14 = ssub.s32 %s9, 1
    %s15 = ssub.s32 %s9, 2
    %s22 = sadd.s32 1, %s17
    %p23 = scmp.ge.s32.totalorder %s22, 1
    %s24 = scalar_select %p23, 0, %s22
    %s25 = sadd.s32 1, %s16
    %s26 = scalar_select %p23, %s25, %s16
    %p27 = scmp.ge.s32.totalorder %s26, 2
    %s28 = scalar_select %p27, 0, %s26
    %s29 = ssub.s32 %s16, %s28
    %s30 = ssub.s32 %s17, %s24
    %s31 = sor.u32 %s29, %s30
    %p32 = scmp.eq.s32.totalorder %s31, 0
    %s34 = sadd.s32 %s33, 1
    %s35 = scalar_select %p32, %s33, %s34
    %p38 = pneg %p32
    %p39 = scmp.eq.s32.totalorder %s9, 1
    %p40 = por %p38, %p39
    %p41 = scmp.ne.s32.totalorder %s33, %s36
    %p42 = scmp.eq.s32.totalorder %s9, 0
    %p43 = por %p41, %p42
    %p44 = scmp.ne.s32.totalorder %s33, %s36
    %p45 = scmp.eq.s32.totalorder %s14, 1
    %p46 = por %p44, %p45
    %p47 = scmp.ne.s32.totalorder %s36, %s37
    %p48 = scmp.eq.s32.totalorder %s14, 0
    %p49 = por %p47, %p48
    %p50 = scmp.ne.s32.totalorder %s36, %s37
    %p51 = scmp.eq.s32.totalorder %s15, 1
    %p52 = por %p50, %p51
    %p54 = scmp.ne.s32.totalorder %s37, %s53
    %p55 = scmp.eq.s32.totalorder %s15, 0
    %p56 = por %p54, %p55
    %s58 = sadd.s32 %s57, 1
    %p61 = scmp.eq.s32.totalorder %s9, 1
    %p62 = scmp.ne.s32.totalorder %s57, %s59
    %p63 = scmp.eq.s32.totalorder %s9, 0
    %p64 = por %p62, %p63
    %p65 = scmp.ne.s32.totalorder %s57, %s59
    %p66 = scmp.eq.s32.totalorder %s14, 1
    %p67 = por %p65, %p66
    %p68 = scmp.ne.s32.totalorder %s59, %s60
    %p69 = scmp.eq.s32.totalorder %s14, 0
    %p70 = por %p68, %p69
    %p71 = scmp.ne.s32.totalorder %s59, %s60
    %p72 = scmp.eq.s32.totalorder %s15, 1
    %p73 = por %p71, %p72
    %p75 = scmp.ne.s32.totalorder %s60, %s74
    %p76 = scmp.eq.s32.totalorder %s15, 0
    %p77 = por %p75, %p76
    %s79 = sadd.s32 %s78, 1
    %p82 = scmp.eq.s32.totalorder %s9, 1
    %p83 = scmp.ne.s32.totalorder %s78, %s80
    %p84 = scmp.eq.s32.totalorder %s9, 0
    %p85 = por %p83, %p84
    %p86 = scmp.ne.s32.totalorder %s78, %s80
    %p87 = scmp.eq.s32.totalorder %s14, 1
    %p88 = por %p86, %p87
    %p89 = scmp.ne.s32.totalorder %s80, %s81
    %p90 = scmp.eq.s32.totalorder %s14, 0
    %p91 = por %p89, %p90
    %p92 = scmp.ne.s32.totalorder %s80, %s81
    %p93 = scmp.eq.s32.totalorder %s15, 1
    %p94 = por %p92, %p93
    %p96 = scmp.ne.s32.totalorder %s81, %s95
    %p97 = scmp.eq.s32.totalorder %s15, 0
    %p98 = por %p96, %p97
    %s99 = ssub.s32 %s16, %s28
    %p100 = scmp.eq.s32.totalorder %s99, 0
    %s102 = sadd.s32 %s101, 1
    %s103 = scalar_select %p100, %s101, %s102
    %p106 = pneg %p100
    %p107 = scmp.eq.s32.totalorder %s9, 1
    %p108 = por %p106, %p107
    %p109 = scmp.ne.s32.totalorder %s101, %s104
    %p110 = scmp.eq.s32.totalorder %s9, 0
    %p111 = por %p109, %p110
    %p112 = scmp.ne.s32.totalorder %s101, %s104
    %p113 = scmp.eq.s32.totalorder %s14, 1
    %p114 = por %p112, %p113
    %p115 = scmp.ne.s32.totalorder %s104, %s105
    %p116 = scmp.eq.s32.totalorder %s14, 0
    %p117 = por %p115, %p116
    %p118 = scmp.ne.s32.totalorder %s104, %s105
    %p119 = scmp.eq.s32.totalorder %s15, 1
    %p120 = por %p118, %p119
    %p122 = scmp.ne.s32.totalorder %s105, %s121
    %p123 = scmp.eq.s32.totalorder %s15, 0
    %p124 = por %p122, %p123
    %p125 = scmp.le.s32.totalorder 1, %s9
    %p126 = scmp.lt.s32.totalorder %s9, 3
    %p127 = pnand %p125, %p126
    %p128 = pneg %p127
    // Predicated region
    $region9: #{gcn_forward_padded.7} parent=5 // pred_check
      _
    $region10: #{gcn_forward_padded.7} parent=5 // pred_check_branch
      %130 = sbr.rel (%p127) target = $region12
    $region11: #{gcn_forward_padded.7} parent=5 // pred_region
      %s131 = ssub.s32 %s9, 1
      // Predicated region
      $region13: #{gcn_forward_padded.7} parent=11 // pred_check
        %p132 = pneg %p70
      $region14: #{gcn_forward_padded.7} parent=11 // pred_check_branch
        %134 = sbr.rel (%p132) target = $region16
      $region15: #{gcn_forward_padded.7} parent=11 // pred_region
        _
      $region16: #{gcn_forward_padded.7} parent=11 // pred_fallthru
        _
      // Predicated region
      $region17: #{gcn_forward_padded.7} parent=11 // pred_check
        %p135 = pneg %p91
      $region18: #{gcn_forward_padded.7} parent=11 // pred_check_branch
        %137 = sbr.rel (%p135) target = $region20
      $region19: #{gcn_forward_padded.7} parent=11 // pred_region
        _
      $region20: #{gcn_forward_padded.7} parent=11 // pred_fallthru
        _
    $region12: #{gcn_forward_padded.7} parent=5 // pred_fallthru
      _
    %p138 = scmp.lt.s32.totalorder %s9, 2
    // Predicated region
    $region21: #{gcn_forward_padded.7} parent=5 // pred_check
      %p139 = pneg %p138
    $region22: #{gcn_forward_padded.7} parent=5 // pred_check_branch
      %141 = sbr.rel (%p139) target = $region24
    $region23: #{gcn_forward_padded.7} parent=5 // pred_region
      // Predicated region
      $region25: #{gcn_forward_padded.7} parent=23 // pred_check
        %p142 = pneg %p43
      $region26: #{gcn_forward_padded.7} parent=23 // pred_check_branch
        %144 = sbr.rel (%p142) target = $region28
      $region27: #{gcn_forward_padded.7} parent=23 // pred_region
        %s145 = smul.u32 16, %s16
        %s146 = smul.u32 2, %s17
        %p147 = scmp.lt.s32.totalorder %s145, 31
        %s148 = scalar_select %p147, %s145, 31
        %p149 = scmp.lt.s32.totalorder %s146, 1
        %s150 = scalar_select %p149, %s146, 1
        %s151 = smul.addr %s148, 2
        %s152 = sadd.s32 %s150, %s151
        %s153 = smul.addr %s152, 4
        %s154 = scalar_lea.vmem %s0, %s153
        %s155 = smul.u32 16, %s16
        %s156 = smul.u32 2, %s17
      $region28: #{gcn_forward_padded.7} parent=23 // pred_fallthru
        _
    $region24: #{gcn_forward_padded.7} parent=5 // pred_fallthru
      _
    %p157 = scmp.le.s32.totalorder 1, %s9
    %p158 = scmp.lt.s32.totalorder %s9, 3
    %p159 = pnand %p157, %p158
    %p160 = pneg %p159
    // Predicated region
    $region29: #{gcn_forward_padded.7} parent=5 // pred_check
      _
    $region30: #{gcn_forward_padded.7} parent=5 // pred_check_branch
      %162 = sbr.rel (%p159) target = $region32
    $region31: #{gcn_forward_padded.7} parent=5 // pred_region
      %s163 = ssub.s32 %s9, 1
      %s164 = smul.u32 16, %s18
      %s165 = smul.u32 2, %s19
      %p166 = scmp.lt.s32.totalorder %s164, 31
      %s167 = scalar_select %p166, %s164, 31
      %p168 = scmp.lt.s32.totalorder %s165, 1
      %s169 = scalar_select %p168, %s165, 1
      %s170 = smul.addr %s167, 2
      %s171 = sadd.s32 %s169, %s170
      %s172 = smul.addr %s171, 4
      %s173 = scalar_lea.vmem %s0, %s172
      %p174 = pneg %p49
      %p175 = pneg %p46
      %p176 = pneg %p70
      %p177 = pneg %p67
      %p178 = pneg %p91
      %p179 = pneg %p88
      %p180 = pneg %p117
      %p181 = pneg %p114
      %s182 = smul.u32 16, %s18
      %p183 = scmp.lt.s32.totalorder %s182, 31
      %s184 = scalar_select %p183, %s182, 31
      %s185 = smul.addr %s184, 4
      %s186 = scalar_lea.vmem %s3, %s185
      %s187 = smul.u32 16, %s18
      %s188 = smul.u32 2, %s19
      %p189 = scmp.lt.s32.totalorder %s187, 31
      %s190 = scalar_select %p189, %s187, 31
      %p191 = scmp.lt.s32.totalorder %s188, 1
      %s192 = scalar_select %p191, %s188, 1
      %s193 = smul.addr %s190, 2
      %s194 = sadd.s32 %s192, %s193
      %s195 = smul.addr %s194, 4
      %s196 = scalar_lea.vmem %s0, %s195
      %s197 = smul.u32 16, %s18
      %s198 = smul.u32 2, %s19
      %s199 = smul.u32 16, %s18
      %p200 = scmp.lt.s32.totalorder %s199, 31
      %s201 = scalar_select %p200, %s199, 31
      %s202 = smul.addr %s201, 4
      %s203 = scalar_lea.vmem %s3, %s202
      %s204 = smul.u32 16, %s18
      %p206 = scmp.eq.s32.totalorder %s19, 0
      // Predicated region
      $region33: #{gcn_forward_padded.7} parent=31 // pred_check
        %p207 = pneg %p206
      $region34: #{gcn_forward_padded.7} parent=31 // pred_check_branch
        %209 = sbr.rel (%p207) target = $region36
      $region35: #{gcn_forward_padded.7} parent=31 // pred_region
        %v210 = vld [vmem:[%s2] sm:$0x1]
        %v212 = vlaneseq
        %v213 = vshrl.u32 %v212, 7
        %v214 = vsub.s32 0, %v213
        %v215 = vrot.slane %v210, %v214
        %217 = vst [vmem:[#allocation2] sm:$0xff] %v215
        %218 = vst [vmem:[#allocation2 + $0x8] sm:$0xff] %v215
        %219 = vst [vmem:[#allocation2 + $0x10] sm:$0xff] %v215
        %220 = vst [vmem:[#allocation2 + $0x18] sm:$0xff] %v215
        %221 = vst [vmem:[#allocation2 + $0x20] sm:$0xff] %v215
        %222 = vst [vmem:[#allocation2 + $0x28] sm:$0xff] %v215
        %223 = vst [vmem:[#allocation2 + $0x30] sm:$0xff] %v215
        %224 = vst [vmem:[#allocation2 + $0x38] sm:$0xff] %v215
        %225 = vst [vmem:[#allocation2 + $0x40] sm:$0xff] %v215
        %226 = vst [vmem:[#allocation2 + $0x48] sm:$0xff] %v215
        %227 = vst [vmem:[#allocation2 + $0x50] sm:$0xff] %v215
        %228 = vst [vmem:[#allocation2 + $0x58] sm:$0xff] %v215
        %229 = vst [vmem:[#allocation2 + $0x60] sm:$0xff] %v215
        %230 = vst [vmem:[#allocation2 + $0x68] sm:$0xff] %v215
        %231 = vst [vmem:[#allocation2 + $0x70] sm:$0xff] %v215
        %232 = vst [vmem:[#allocation2 + $0x78] sm:$0xff] %v215
      $region36: #{gcn_forward_padded.7} parent=31 // pred_fallthru
        _
      %s233 = smul.u32 %s19, 256
      %s234 = sshra.s32 %s233, 3
      %s235 = sand.u32 %s233, 7
      %s236 = smul.addr %s234, 4
      %s237 = scalar_lea.vmem %s1, %s236
      %v238 = vld [vmem:[%s237] sm:$0xf]
      %v239 = vld [vmem:[%s237 + $0x4] sm:$0xf]
      %v240 = vld [vmem:[%s237 + $0x8] sm:$0xf]
      %v241 = vld [vmem:[%s237 + $0xc] sm:$0xf]
      %v242 = vld [vmem:[%s237 + $0x10] sm:$0xf]
      %v243 = vld [vmem:[%s237 + $0x14] sm:$0xf]
      %v244 = vld [vmem:[%s237 + $0x18] sm:$0xf]
      %v245 = vld [vmem:[%s237 + $0x1c] sm:$0xf]
      %v246 = vld [vmem:[%s237 + $0x20] sm:$0xf]
      %v247 = vld [vmem:[%s237 + $0x24] sm:$0xf]
      %v248 = vld [vmem:[%s237 + $0x28] sm:$0xf]
      %v249 = vld [vmem:[%s237 + $0x2c] sm:$0xf]
      %v250 = vld [vmem:[%s237 + $0x30] sm:$0xf]
      %v251 = vld [vmem:[%s237 + $0x34] sm:$0xf]
      %v252 = vld [vmem:[%s237 + $0x38] sm:$0xf]
      %v253 = vld [vmem:[%s237 + $0x3c] sm:$0xf]
      %v254 = vld [vmem:[%s237 + $0x40] sm:$0xf]
      %v255 = vld [vmem:[%s237 + $0x44] sm:$0xf]
      %v256 = vld [vmem:[%s237 + $0x48] sm:$0xf]
      %v257 = vld [vmem:[%s237 + $0x4c] sm:$0xf]
      %v258 = vld [vmem:[%s237 + $0x50] sm:$0xf]
      %v259 = vld [vmem:[%s237 + $0x54] sm:$0xf]
      %v260 = vld [vmem:[%s237 + $0x58] sm:$0xf]
      %v261 = vld [vmem:[%s237 + $0x5c] sm:$0xf]
      %v262 = vld [vmem:[%s237 + $0x60] sm:$0xf]
      %v263 = vld [vmem:[%s237 + $0x64] sm:$0xf]
      %v264 = vld [vmem:[%s237 + $0x68] sm:$0xf]
      %v265 = vld [vmem:[%s237 + $0x6c] sm:$0xf]
      %v266 = vld [vmem:[%s237 + $0x70] sm:$0xf]
      %v267 = vld [vmem:[%s237 + $0x74] sm:$0xf]
      %v268 = vld [vmem:[%s237 + $0x78] sm:$0xf]
      %v269 = vld [vmem:[%s237 + $0x7c] sm:$0xf]
      %v270 = vld [vmem:[#allocation2] sm:$0xff]
      %v271 = vld [vmem:[#allocation2 + $0x8] sm:$0xff]
      %v272 = vld [vmem:[#allocation2 + $0x10] sm:$0xff]
      %v273 = vld [vmem:[#allocation2 + $0x18] sm:$0xff]
      %v274 = vld [vmem:[#allocation2 + $0x20] sm:$0xff]
      %v275 = vld [vmem:[#allocation2 + $0x28] sm:$0xff]
      %v276 = vld [vmem:[#allocation2 + $0x30] sm:$0xff]
      %v277 = vld [vmem:[#allocation2 + $0x38] sm:$0xff]
      %v278 = vld [vmem:[#allocation2 + $0x40] sm:$0xff]
      %v279 = vld [vmem:[#allocation2 + $0x48] sm:$0xff]
      %v280 = vld [vmem:[#allocation2 + $0x50] sm:$0xff]
      %v281 = vld [vmem:[#allocation2 + $0x58] sm:$0xff]
      %v282 = vld [vmem:[#allocation2 + $0x60] sm:$0xff]
      %v283 = vld [vmem:[#allocation2 + $0x68] sm:$0xff]
      %v284 = vld [vmem:[#allocation2 + $0x70] sm:$0xff]
      %v285 = vld [vmem:[#allocation2 + $0x78] sm:$0xff]
      %v286 = vld [vmem:[%s196] sm:$0xff]
      %v287 = vld [vmem:[%s196 + $0x8] sm:$0xff]
      %v288 = vld [vmem:[%s196 + $0x10] sm:$0xff]
      %v289 = vld [vmem:[%s196 + $0x18] sm:$0xff]
      %v290 = vld [vmem:[%s196 + $0x20] sm:$0xff]
      %v291 = vld [vmem:[%s196 + $0x28] sm:$0xff]
      %v292 = vld [vmem:[%s196 + $0x30] sm:$0xff]
      %v293 = vld [vmem:[%s196 + $0x38] sm:$0xff]
      %v294 = vld [vmem:[%s196 + $0x40] sm:$0xff]
      %v295 = vld [vmem:[%s196 + $0x48] sm:$0xff]
      %v296 = vld [vmem:[%s196 + $0x50] sm:$0xff]
      %v297 = vld [vmem:[%s196 + $0x58] sm:$0xff]
      %v298 = vld [vmem:[%s196 + $0x60] sm:$0xff]
      %v299 = vld [vmem:[%s196 + $0x68] sm:$0xff]
      %v300 = vld [vmem:[%s196 + $0x70] sm:$0xff]
      %v301 = vld [vmem:[%s196 + $0x78] sm:$0xff]
      %v318 = vunpack.c.l.b16 %v286
      %v319 = vunpack.c.h.b16 %v286
      %v320 = vunpack.c.l.b16 %v287
      %v321 = vunpack.c.h.b16 %v287
      %v322 = vunpack.c.l.b16 %v288
      %v323 = vunpack.c.h.b16 %v288
      %v324 = vunpack.c.l.b16 %v289
      %v325 = vunpack.c.h.b16 %v289
      %v326 = vunpack.c.l.b16 %v290
      %v327 = vunpack.c.h.b16 %v290
      %v328 = vunpack.c.l.b16 %v291
      %v329 = vunpack.c.h.b16 %v291
      %v330 = vunpack.c.l.b16 %v292
      %v331 = vunpack.c.h.b16 %v292
      %v332 = vunpack.c.l.b16 %v293
      %v333 = vunpack.c.h.b16 %v293
      %v334 = vunpack.c.l.b16 %v294
      %v335 = vunpack.c.h.b16 %v294
      %v336 = vunpack.c.l.b16 %v295
      %v337 = vunpack.c.h.b16 %v295
      %v338 = vunpack.c.l.b16 %v296
      %v339 = vunpack.c.h.b16 %v296
      %v340 = vunpack.c.l.b16 %v297
      %v341 = vunpack.c.h.b16 %v297
      %v342 = vunpack.c.l.b16 %v298
      %v343 = vunpack.c.h.b16 %v298
      %v344 = vunpack.c.l.b16 %v299
      %v345 = vunpack.c.h.b16 %v299
      %v346 = vunpack.c.l.b16 %v300
      %v347 = vunpack.c.h.b16 %v300
      %v348 = vunpack.c.l.b16 %v301
      %v349 = vunpack.c.h.b16 %v301
      %v350 = vpack.c.b16 %v320, %v318
      %v351 = vpack.c.b16 %v321, %v319
      %v352 = vpack.c.b16 %v324, %v322
      %v353 = vpack.c.b16 %v325, %v323
      %v354 = vpack.c.b16 %v328, %v326
      %v355 = vpack.c.b16 %v329, %v327
      %v356 = vpack.c.b16 %v332, %v330
      %v357 = vpack.c.b16 %v333, %v331
      %v358 = vpack.c.b16 %v336, %v334
      %v359 = vpack.c.b16 %v337, %v335
      %v360 = vpack.c.b16 %v340, %v338
      %v361 = vpack.c.b16 %v341, %v339
      %v362 = vpack.c.b16 %v344, %v342
      %v363 = vpack.c.b16 %v345, %v343
      %v364 = vpack.c.b16 %v348, %v346
      %v365 = vpack.c.b16 %v349, %v347
      %v414 = vunpack.c.l.b16 %v238
      %v415 = vunpack.c.l.b16 %v239
      %v416 = vunpack.c.l.b16 %v240
      %v417 = vunpack.c.l.b16 %v241
      %v418 = vunpack.c.l.b16 %v242
      %v419 = vunpack.c.l.b16 %v243
      %v420 = vunpack.c.l.b16 %v244
      %v421 = vunpack.c.l.b16 %v245
      %v422 = vunpack.c.l.b16 %v246
      %v423 = vunpack.c.l.b16 %v247
      %v424 = vunpack.c.l.b16 %v248
      %v425 = vunpack.c.l.b16 %v249
      %v426 = vunpack.c.l.b16 %v250
      %v427 = vunpack.c.l.b16 %v251
      %v428 = vunpack.c.l.b16 %v252
      %v429 = vunpack.c.l.b16 %v253
      %v430 = vunpack.c.l.b16 %v254
      %v431 = vunpack.c.l.b16 %v255
      %v432 = vunpack.c.l.b16 %v256
      %v433 = vunpack.c.l.b16 %v257
      %v434 = vunpack.c.l.b16 %v258
      %v435 = vunpack.c.l.b16 %v259
      %v436 = vunpack.c.l.b16 %v260
      %v437 = vunpack.c.l.b16 %v261
      %v438 = vunpack.c.l.b16 %v262
      %v439 = vunpack.c.l.b16 %v263
      %v440 = vunpack.c.l.b16 %v264
      %v441 = vunpack.c.l.b16 %v265
      %v442 = vunpack.c.l.b16 %v266
      %v443 = vunpack.c.l.b16 %v267
      %v444 = vunpack.c.l.b16 %v268
      %v445 = vunpack.c.l.b16 %v269
      %v446 = vpack.c.b16 %v415, %v414
      %v447 = vpack.c.b16 %v417, %v416
      %v448 = vpack.c.b16 %v419, %v418
      %v449 = vpack.c.b16 %v421, %v420
      %v450 = vpack.c.b16 %v423, %v422
      %v451 = vpack.c.b16 %v425, %v424
      %v452 = vpack.c.b16 %v427, %v426
      %v453 = vpack.c.b16 %v429, %v428
      %v454 = vpack.c.b16 %v431, %v430
      %v455 = vpack.c.b16 %v433, %v432
      %v456 = vpack.c.b16 %v435, %v434
      %v457 = vpack.c.b16 %v437, %v436
      %v458 = vpack.c.b16 %v439, %v438
      %v459 = vpack.c.b16 %v441, %v440
      %v460 = vpack.c.b16 %v443, %v442
      %v461 = vpack.c.b16 %v445, %v444
      %478 = vmatprep.subr.bf16.mxu0 0
      %479 = vmatpush1.bf16.msra.mxu0 %v446
      %480 = vmatprep.subr.bf16.mxu0 0
      %481 = vmatpush1.bf16.msra.mxu0 %v447
      %482 = vmatprep.subr.bf16.mxu0 0
      %483 = vmatpush1.bf16.msra.mxu0 %v448
      %484 = vmatprep.subr.bf16.mxu0 0
      %485 = vmatpush1.bf16.msra.mxu0 %v449
      %486 = vmatprep.subr.bf16.mxu0 0
      %487 = vmatpush1.bf16.msra.mxu0 %v450
      %488 = vmatprep.subr.bf16.mxu0 0
      %489 = vmatpush1.bf16.msra.mxu0 %v451
      %490 = vmatprep.subr.bf16.mxu0 0
      %491 = vmatpush1.bf16.msra.mxu0 %v452
      %492 = vmatprep.subr.bf16.mxu0 0
      %493 = vmatpush1.bf16.msra.mxu0 %v453
      %494 = vmatprep.subr.bf16.mxu0 0
      %495 = vmatpush1.bf16.msra.mxu0 %v454
      %496 = vmatprep.subr.bf16.mxu0 0
      %497 = vmatpush1.bf16.msra.mxu0 %v455
      %498 = vmatprep.subr.bf16.mxu0 0
      %499 = vmatpush1.bf16.msra.mxu0 %v456
      %500 = vmatprep.subr.bf16.mxu0 0
      %501 = vmatpush1.bf16.msra.mxu0 %v457
      %502 = vmatprep.subr.bf16.mxu0 0
      %503 = vmatpush1.bf16.msra.mxu0 %v458
      %504 = vmatprep.subr.bf16.mxu0 0
      %505 = vmatpush1.bf16.msra.mxu0 %v459
      %506 = vmatprep.subr.bf16.mxu0 0
      %507 = vmatpush1.bf16.msra.mxu0 %v460
      %508 = vmatprep.subr.bf16.mxu0 0
      %509 = vmatpush1.bf16.msra.mxu0 %v461
      %510 = vmatprep.mubr.bf16.mxu0 %v351
      %511 = vmatmul.mubr.bf16.gmra.mrb[0].mxu0 %v350
      %v512 = vpop.f32.mrb[0].mxu0
      %v513 = vadd.f32 0.0, %v512
      %v514 = vpop.f32.mrb[0].mxu0
      %v515 = vpop.f32.mrb[0].mxu0
      %v516 = vadd.f32 0.0, %v515
      %v517 = vpop.f32.mrb[0].mxu0
      %518 = vmatprep.mubr.bf16.mxu0 %v353
      %519 = vmatmul.mubr.bf16.gmra.mrb[0].mxu0 %v352
      %v520 = vpop.f32.mrb[0].mxu0
      %v521 = vadd.f32 0.0, %v520
      %v522 = vpop.f32.mrb[0].mxu0
      %v523 = vpop.f32.mrb[0].mxu0
      %v524 = vadd.f32 0.0, %v523
      %v525 = vpop.f32.mrb[0].mxu0
      %526 = vmatprep.mubr.bf16.mxu0 %v355
      %527 = vmatmul.mubr.bf16.gmra.mrb[0].mxu0 %v354
      %v528 = vpop.f32.mrb[0].mxu0
      %v529 = vadd.f32 0.0, %v528
      %v530 = vpop.f32.mrb[0].mxu0
      %v531 = vpop.f32.mrb[0].mxu0
      %v532 = vadd.f32 0.0, %v531
      %v533 = vpop.f32.mrb[0].mxu0
      %534 = vmatprep.mubr.bf16.mxu0 %v357
      %535 = vmatmul.mubr.bf16.gmra.mrb[0].mxu0 %v356
      %v536 = vpop.f32.mrb[0].mxu0
      %v537 = vadd.f32 0.0, %v536
      %v538 = vpop.f32.mrb[0].mxu0
      %v539 = vpop.f32.mrb[0].mxu0
      %v540 = vadd.f32 0.0, %v539
      %v541 = vpop.f32.mrb[0].mxu0
      %542 = vmatprep.mubr.bf16.mxu0 %v359
      %543 = vmatmul.mubr.bf16.gmra.mrb[0].mxu0 %v358
      %v544 = vpop.f32.mrb[0].mxu0
      %v545 = vadd.f32 0.0, %v544
      %v546 = vpop.f32.mrb[0].mxu0
      %v547 = vpop.f32.mrb[0].mxu0
      %v548 = vadd.f32 0.0, %v547
      %v549 = vpop.f32.mrb[0].mxu0
      %550 = vmatprep.mubr.bf16.mxu0 %v361
      %551 = vmatmul.mubr.bf16.gmra.mrb[0].mxu0 %v360
      %v552 = vpop.f32.mrb[0].mxu0
      %v553 = vadd.f32 0.0, %v552
      %v554 = vpop.f32.mrb[0].mxu0
      %v555 = vpop.f32.mrb[0].mxu0
      %v556 = vadd.f32 0.0, %v555
      %v557 = vpop.f32.mrb[0].mxu0
      %558 = vmatprep.mubr.bf16.mxu0 %v363
      %559 = vmatmul.mubr.bf16.gmra.mrb[0].mxu0 %v362
      %v560 = vpop.f32.mrb[0].mxu0
      %v561 = vadd.f32 0.0, %v560
      %v562 = vpop.f32.mrb[0].mxu0
      %v563 = vpop.f32.mrb[0].mxu0
      %v564 = vadd.f32 0.0, %v563
      %v565 = vpop.f32.mrb[0].mxu0
      %566 = vmatprep.mubr.bf16.mxu0 %v365
      %567 = vmatmul.mubr.bf16.gmra.mrb[0].mxu0 %v364
      %v568 = vpop.f32.mrb[0].mxu0
      %v569 = vadd.f32 0.0, %v568
      %v570 = vpop.f32.mrb[0].mxu0
      %v571 = vpop.f32.mrb[0].mxu0
      %v572 = vadd.f32 0.0, %v571
      %v573 = vpop.f32.mrb[0].mxu0
      %574 = vdwg.mxu0
      %v575 = vadd.f32 %v270, %v513
      %v576 = vadd.f32 %v271, %v516
      %v577 = vadd.f32 %v272, %v521
      %v578 = vadd.f32 %v273, %v524
      %v579 = vadd.f32 %v274, %v529
      %v580 = vadd.f32 %v275, %v532
      %v581 = vadd.f32 %v276, %v537
      %v582 = vadd.f32 %v277, %v540
      %v583 = vadd.f32 %v278, %v545
      %v584 = vadd.f32 %v279, %v548
      %v585 = vadd.f32 %v280, %v553
      %v586 = vadd.f32 %v281, %v556
      %v587 = vadd.f32 %v282, %v561
      %v588 = vadd.f32 %v283, %v564
      %v589 = vadd.f32 %v284, %v569
      %v590 = vadd.f32 %v285, %v572
      %591 = vst [vmem:[#allocation2] sm:$0xff] %v575
      %592 = vst [vmem:[#allocation2 + $0x8] sm:$0xff] %v576
      %593 = vst [vmem:[#allocation2 + $0x10] sm:$0xff] %v577
      %594 = vst [vmem:[#allocation2 + $0x18] sm:$0xff] %v578
      %595 = vst [vmem:[#allocation2 + $0x20] sm:$0xff] %v579
      %596 = vst [vmem:[#allocation2 + $0x28] sm:$0xff] %v580
      %597 = vst [vmem:[#allocation2 + $0x30] sm:$0xff] %v581
      %598 = vst [vmem:[#allocation2 + $0x38] sm:$0xff] %v582
      %599 = vst [vmem:[#allocation2 + $0x40] sm:$0xff] %v583
      %600 = vst [vmem:[#allocation2 + $0x48] sm:$0xff] %v584
      %601 = vst [vmem:[#allocation2 + $0x50] sm:$0xff] %v585
      %602 = vst [vmem:[#allocation2 + $0x58] sm:$0xff] %v586
      %603 = vst [vmem:[#allocation2 + $0x60] sm:$0xff] %v587
      %604 = vst [vmem:[#allocation2 + $0x68] sm:$0xff] %v588
      %605 = vst [vmem:[#allocation2 + $0x70] sm:$0xff] %v589
      %606 = vst [vmem:[#allocation2 + $0x78] sm:$0xff] %v590
      // Predicated region
      $region37: #{gcn_forward_padded.7} parent=31 // pred_check
        %p607 = pneg %p206
      $region38: #{gcn_forward_padded.7} parent=31 // pred_check_branch
        %609 = sbr.rel (%p607) target = $region40
      $region39: #{gcn_forward_padded.7} parent=31 // pred_region
        %v610 = vld [vmem:[#allocation2] sm:$0xff]
        %v611 = vld [vmem:[#allocation2 + $0x8] sm:$0xff]
        %v612 = vld [vmem:[#allocation2 + $0x10] sm:$0xff]
        %v613 = vld [vmem:[#allocation2 + $0x18] sm:$0xff]
        %v614 = vld [vmem:[#allocation2 + $0x20] sm:$0xff]
        %v615 = vld [vmem:[#allocation2 + $0x28] sm:$0xff]
        %v616 = vld [vmem:[#allocation2 + $0x30] sm:$0xff]
        %v617 = vld [vmem:[#allocation2 + $0x38] sm:$0xff]
        %v618 = vld [vmem:[#allocation2 + $0x40] sm:$0xff]
        %v619 = vld [vmem:[#allocation2 + $0x48] sm:$0xff]
        %v620 = vld [vmem:[#allocation2 + $0x50] sm:$0xff]
        %v621 = vld [vmem:[#allocation2 + $0x58] sm:$0xff]
        %v622 = vld [vmem:[#allocation2 + $0x60] sm:$0xff]
        %v623 = vld [vmem:[#allocation2 + $0x68] sm:$0xff]
        %v624 = vld [vmem:[#allocation2 + $0x70] sm:$0xff]
        %v625 = vld [vmem:[#allocation2 + $0x78] sm:$0xff]
        %v626 = vmax.f32 %v610, 0.0
        %v627 = vmax.f32 %v611, 0.0
        %v628 = vmax.f32 %v612, 0.0
        %v629 = vmax.f32 %v613, 0.0
        %v630 = vmax.f32 %v614, 0.0
        %v631 = vmax.f32 %v615, 0.0
        %v632 = vmax.f32 %v616, 0.0
        %v633 = vmax.f32 %v617, 0.0
        %v634 = vmax.f32 %v618, 0.0
        %v635 = vmax.f32 %v619, 0.0
        %v636 = vmax.f32 %v620, 0.0
        %v637 = vmax.f32 %v621, 0.0
        %v638 = vmax.f32 %v622, 0.0
        %v639 = vmax.f32 %v623, 0.0
        %v640 = vmax.f32 %v624, 0.0
        %v641 = vmax.f32 %v625, 0.0
        %v642 = vpack.c.bf16 %v627, %v626
        %v643 = vpack.c.bf16 %v629, %v628
        %v644 = vpack.c.bf16 %v631, %v630
        %v645 = vpack.c.bf16 %v633, %v632
        %v646 = vpack.c.bf16 %v635, %v634
        %v647 = vpack.c.bf16 %v637, %v636
        %v648 = vpack.c.bf16 %v639, %v638
        %v649 = vpack.c.bf16 %v641, %v640
        %v658 = vunpack.c.l.b16 %v642
        %v659 = vunpack.c.h.b16 %v642
        %v660 = vunpack.c.l.b16 %v643
        %v661 = vunpack.c.h.b16 %v643
        %v662 = vunpack.c.l.b16 %v644
        %v663 = vunpack.c.h.b16 %v644
        %v664 = vunpack.c.l.b16 %v645
        %v665 = vunpack.c.h.b16 %v645
        %v666 = vunpack.c.l.b16 %v646
        %v667 = vunpack.c.h.b16 %v646
        %v668 = vunpack.c.l.b16 %v647
        %v669 = vunpack.c.h.b16 %v647
        %v670 = vunpack.c.l.b16 %v648
        %v671 = vunpack.c.h.b16 %v648
        %v672 = vunpack.c.l.b16 %v649
        %v673 = vunpack.c.h.b16 %v649
        %v674 = vpack.c.b16 %v658, %v658
        %v675 = vpack.c.b16 %v659, %v659
        %v676 = vpack.c.b16 %v660, %v660
        %v677 = vpack.c.b16 %v661, %v661
        %v678 = vpack.c.b16 %v662, %v662
        %v679 = vpack.c.b16 %v663, %v663
        %v680 = vpack.c.b16 %v664, %v664
        %v681 = vpack.c.b16 %v665, %v665
        %v682 = vpack.c.b16 %v666, %v666
        %v683 = vpack.c.b16 %v667, %v667
        %v684 = vpack.c.b16 %v668, %v668
        %v685 = vpack.c.b16 %v669, %v669
        %v686 = vpack.c.b16 %v670, %v670
        %v687 = vpack.c.b16 %v671, %v671
        %v688 = vpack.c.b16 %v672, %v672
        %v689 = vpack.c.b16 %v673, %v673
        %706 = vst [vmem:[%s203] sm:$0xf] %v674
        %707 = vst [vmem:[%s203 + $0x4] sm:$0xf] %v675
        %708 = vst [vmem:[%s203 + $0x8] sm:$0xf] %v676
        %709 = vst [vmem:[%s203 + $0xc] sm:$0xf] %v677
        %710 = vst [vmem:[%s203 + $0x10] sm:$0xf] %v678
        %711 = vst [vmem:[%s203 + $0x14] sm:$0xf] %v679
        %712 = vst [vmem:[%s203 + $0x18] sm:$0xf] %v680
        %713 = vst [vmem:[%s203 + $0x1c] sm:$0xf] %v681
        %714 = vst [vmem:[%s203 + $0x20] sm:$0xf] %v682
        %715 = vst [vmem:[%s203 + $0x24] sm:$0xf] %v683
        %716 = vst [vmem:[%s203 + $0x28] sm:$0xf] %v684
        %717 = vst [vmem:[%s203 + $0x2c] sm:$0xf] %v685
        %718 = vst [vmem:[%s203 + $0x30] sm:$0xf] %v686
        %719 = vst [vmem:[%s203 + $0x34] sm:$0xf] %v687
        %720 = vst [vmem:[%s203 + $0x38] sm:$0xf] %v688
        %721 = vst [vmem:[%s203 + $0x3c] sm:$0xf] %v689
      $region40: #{gcn_forward_padded.7} parent=31 // pred_fallthru
        _
      %s722 = smul.u32 16, %s18
      %p723 = scmp.lt.s32.totalorder %s722, 31
      %s724 = scalar_select %p723, %s722, 31
      %s725 = smul.addr %s724, 4
      %s726 = scalar_lea.vmem %s3, %s725
      // Predicated region
      $region41: #{gcn_forward_padded.7} parent=31 // pred_check
        %p727 = pneg %p114
      $region42: #{gcn_forward_padded.7} parent=31 // pred_check_branch
        %729 = sbr.rel (%p727) target = $region44
      $region43: #{gcn_forward_padded.7} parent=31 // pred_region
        %s730 = smul.u32 16, %s18
      $region44: #{gcn_forward_padded.7} parent=31 // pred_fallthru
        _
    $region32: #{gcn_forward_padded.7} parent=5 // pred_fallthru
      _
    %p731 = scmp.le.s32.totalorder 2, %s9
    // Predicated region
    $region45: #{gcn_forward_padded.7} parent=5 // pred_check
      %p732 = pneg %p731
    $region46: #{gcn_forward_padded.7} parent=5 // pred_check_branch
      %734 = sbr.rel (%p732) target = $region48
    $region47: #{gcn_forward_padded.7} parent=5 // pred_region
      %s735 = ssub.s32 %s9, 2
      // Predicated region
      $region49: #{gcn_forward_padded.7} parent=47 // pred_check
        %p736 = pneg %p120
      $region50: #{gcn_forward_padded.7} parent=47 // pred_check_branch
        %738 = sbr.rel (%p736) target = $region52
      $region51: #{gcn_forward_padded.7} parent=47 // pred_region
        %s739 = smul.u32 16, %s20
        %p740 = scmp.lt.s32.totalorder %s739, 31
        %s741 = scalar_select %p740, %s739, 31
        %s742 = smul.addr %s741, 4
        %s743 = scalar_lea.vmem %s3, %s742
      $region52: #{gcn_forward_padded.7} parent=47 // pred_fallthru
        _
    $region48: #{gcn_forward_padded.7} parent=5 // pred_fallthru
      _
  $region6: #{gcn_forward_padded.7} parent=0 // loop_footer
    %s13 = sadd.s32 1, %s9
  $region7: #{gcn_forward_padded.7} parent=0 // loop_footer_branch
    %8 = sbr.rel target = $region3
  $region8: #{gcn_forward_padded.7} parent=0 // loop_exit
    _

// kernel: gcn_forward_padded.11
$region0: #{gcn_forward_padded.11}
  #allocation0 [shape = 'u32[]', space=smem, size = 0x4, offset = 0x4, fixed_abs, tag = 'smem constant byte address 0x4 - core index']
  #allocation1 [shape = 'u32[144,128]{1,0:T(1,128)}', space=vmem, size = 0x12000, scoped, tag = 'internal scratch']
  %s0 = inlined_call_operand.vmem [shape: bf16[256,256], index: 0, kind: input, shape index: {}]
  %s1 = inlined_call_operand.vmem [shape: bf16[256,128], index: 1, kind: input, shape index: {}]
  %s2 = inlined_call_operand.vmem [shape: f32[1,128], index: 2, kind: input, shape index: {}]
  %s3 = inlined_call_operand.hbm [shape: f32[256,128], index: 3, kind: output, shape index: {}]
  %s4 = sld [smem:[#allocation0]]
  $region53: #{gcn_forward_padded.11} parent=0
    _
  %s6 = ssub.s32 1, %s4
  %s7 = scalar_select 0, %s6, %s4
  $region1: #{gcn_forward_padded.11} parent=0
    #allocation2 [shape = 'u8[131072]{0}', space=vmem, size = 0x20000, scoped, tag = 'output window, operand 0']
    #allocation3 [shape = 's32[2]{0}', space=sflag, size = 0x8, scoped, tag = 'scoped memory for gcn_forward_padded.11']
    %8 = vsyncpa [#allocation3], 0
    %s9 = scalar_lea.sflag [#allocation3], 1
    %10 = vsyncpa %s9, 0
    loop: start=0, step=1, limit=4
    $region2: #{gcn_forward_padded.11} parent=1 // loop_pre_header
      _
    $region3: #{gcn_forward_padded.11} parent=1 // loop_header
      %s12 = sphi 0, %s16
      %p13 = scmp.ge.s32.totalorder %s12, 4
      %s19 = sphi 0, %s31
      %s20 = sphi 0, %s27
      %s21 = sphi 0, %s19
      %s22 = sphi 0, %s20
      %s23 = sphi 0, %s21
      %s24 = sphi 0, %s22
      %s36 = sphi 0, %s38
      %s39 = sphi 0, %s36
      %s40 = sphi 0, %s39
      %s56 = sphi 0, %s40
      %s60 = sphi 0, %s60
      %s62 = sphi 0, %s60
      %s63 = sphi 0, %s62
      %s77 = sphi 0, %s63
      %s81 = sphi 0, %s81
      %s83 = sphi 0, %s81
      %s84 = sphi 0, %s83
      %s98 = sphi 0, %s84
      %s104 = sphi 0, %s106
      %s107 = sphi 0, %s104
      %s108 = sphi 0, %s107
      %s124 = sphi 0, %s108
    $region4: #{gcn_forward_padded.11} parent=1 // loop_header_branch
      %15 = sbr.rel (%p13) target = $region8
    $region5: #{gcn_forward_padded.11} parent=1 // loop_body
      %s17 = ssub.s32 %s12, 1
      %s18 = ssub.s32 %s12, 2
      %s25 = sadd.s32 1, %s20
      %p26 = scmp.ge.s32.totalorder %s25, 1
      %s27 = scalar_select %p26, 0, %s25
      %s28 = sadd.s32 1, %s19
      %s29 = scalar_select %p26, %s28, %s19
      %p30 = scmp.ge.s32.totalorder %s29, 2
      %s31 = scalar_select %p30, 0, %s29
      %s32 = ssub.s32 %s19, %s31
      %s33 = ssub.s32 %s20, %s27
      %s34 = sor.u32 %s32, %s33
      %p35 = scmp.eq.s32.totalorder %s34, 0
      %s37 = sadd.s32 %s36, 1
      %s38 = scalar_select %p35, %s36, %s37
      %p41 = pneg %p35
      %p42 = scmp.eq.s32.totalorder %s12, 1
      %p43 = por %p41, %p42
      %p44 = scmp.ne.s32.totalorder %s36, %s39
      %p45 = scmp.eq.s32.totalorder %s12, 0
      %p46 = por %p44, %p45
      %p47 = scmp.ne.s32.totalorder %s36, %s39
      %p48 = scmp.eq.s32.totalorder %s17, 1
      %p49 = por %p47, %p48
      %p50 = scmp.ne.s32.totalorder %s39, %s40
      %p51 = scmp.eq.s32.totalorder %s17, 0
      %p52 = por %p50, %p51
      %p53 = scmp.ne.s32.totalorder %s39, %s40
      %p54 = scmp.eq.s32.totalorder %s18, 1
      %p55 = por %p53, %p54
      %p57 = scmp.ne.s32.totalorder %s40, %s56
      %p58 = scmp.eq.s32.totalorder %s18, 0
      %p59 = por %p57, %p58
      %s61 = sadd.s32 %s60, 1
      %p64 = scmp.eq.s32.totalorder %s12, 1
      %p65 = scmp.ne.s32.totalorder %s60, %s62
      %p66 = scmp.eq.s32.totalorder %s12, 0
      %p67 = por %p65, %p66
      %p68 = scmp.ne.s32.totalorder %s60, %s62
      %p69 = scmp.eq.s32.totalorder %s17, 1
      %p70 = por %p68, %p69
      %p71 = scmp.ne.s32.totalorder %s62, %s63
      %p72 = scmp.eq.s32.totalorder %s17, 0
      %p73 = por %p71, %p72
      %p74 = scmp.ne.s32.totalorder %s62, %s63
      %p75 = scmp.eq.s32.totalorder %s18, 1
      %p76 = por %p74, %p75
      %p78 = scmp.ne.s32.totalorder %s63, %s77
      %p79 = scmp.eq.s32.totalorder %s18, 0
      %p80 = por %p78, %p79
      %s82 = sadd.s32 %s81, 1
      %p85 = scmp.eq.s32.totalorder %s12, 1
      %p86 = scmp.ne.s32.totalorder %s81, %s83
      %p87 = scmp.eq.s32.totalorder %s12, 0
      %p88 = por %p86, %p87
      %p89 = scmp.ne.s32.totalorder %s81, %s83
      %p90 = scmp.eq.s32.totalorder %s17, 1
      %p91 = por %p89, %p90
      %p92 = scmp.ne.s32.totalorder %s83, %s84
      %p93 = scmp.eq.s32.totalorder %s17, 0
      %p94 = por %p92, %p93
      %p95 = scmp.ne.s32.totalorder %s83, %s84
      %p96 = scmp.eq.s32.totalorder %s18, 1
      %p97 = por %p95, %p96
      %p99 = scmp.ne.s32.totalorder %s84, %s98
      %p100 = scmp.eq.s32.totalorder %s18, 0
      %p101 = por %p99, %p100
      %s102 = ssub.s32 %s19, %s31
      %p103 = scmp.eq.s32.totalorder %s102, 0
      %s105 = sadd.s32 %s104, 1
      %s106 = scalar_select %p103, %s104, %s105
      %p109 = pneg %p103
      %p110 = scmp.eq.s32.totalorder %s12, 1
      %p111 = por %p109, %p110
      %p112 = scmp.ne.s32.totalorder %s104, %s107
      %p113 = scmp.eq.s32.totalorder %s12, 0
      %p114 = por %p112, %p113
      %p115 = scmp.ne.s32.totalorder %s104, %s107
      %p116 = scmp.eq.s32.totalorder %s17, 1
      %p117 = por %p115, %p116
      %p118 = scmp.ne.s32.totalorder %s107, %s108
      %p119 = scmp.eq.s32.totalorder %s17, 0
      %p120 = por %p118, %p119
      %p121 = scmp.ne.s32.totalorder %s107, %s108
      %p122 = scmp.eq.s32.totalorder %s18, 1
      %p123 = por %p121, %p122
      %p125 = scmp.ne.s32.totalorder %s108, %s124
      %p126 = scmp.eq.s32.totalorder %s18, 0
      %p127 = por %p125, %p126
      %p128 = scmp.le.s32.totalorder 1, %s12
      %p129 = scmp.lt.s32.totalorder %s12, 3
      %p130 = pnand %p128, %p129
      %p131 = pneg %p130
      // Predicated region
      $region9: #{gcn_forward_padded.11} parent=5 // pred_check
        _
      $region10: #{gcn_forward_padded.11} parent=5 // pred_check_branch
        %133 = sbr.rel (%p130) target = $region12
      $region11: #{gcn_forward_padded.11} parent=5 // pred_region
        %s134 = ssub.s32 %s12, 1
        // Predicated region
        $region13: #{gcn_forward_padded.11} parent=11 // pred_check
          %p135 = pneg %p73
        $region14: #{gcn_forward_padded.11} parent=11 // pred_check_branch
          %137 = sbr.rel (%p135) target = $region16
        $region15: #{gcn_forward_padded.11} parent=11 // pred_region
          _
        $region16: #{gcn_forward_padded.11} parent=11 // pred_fallthru
          _
        // Predicated region
        $region17: #{gcn_forward_padded.11} parent=11 // pred_check
          %p138 = pneg %p94
        $region18: #{gcn_forward_padded.11} parent=11 // pred_check_branch
          %140 = sbr.rel (%p138) target = $region20
        $region19: #{gcn_forward_padded.11} parent=11 // pred_region
          _
        $region20: #{gcn_forward_padded.11} parent=11 // pred_fallthru
          _
      $region12: #{gcn_forward_padded.11} parent=5 // pred_fallthru
        _
      %p141 = scmp.lt.s32.totalorder %s12, 2
      // Predicated region
      $region21: #{gcn_forward_padded.11} parent=5 // pred_check
        %p142 = pneg %p141
      $region22: #{gcn_forward_padded.11} parent=5 // pred_check_branch
        %144 = sbr.rel (%p142) target = $region24
      $region23: #{gcn_forward_padded.11} parent=5 // pred_region
        // Predicated region
        $region25: #{gcn_forward_padded.11} parent=23 // pred_check
          %p145 = pneg %p46
        $region26: #{gcn_forward_padded.11} parent=23 // pred_check_branch
          %147 = sbr.rel (%p145) target = $region28
        $region27: #{gcn_forward_padded.11} parent=23 // pred_region
          %s148 = smul.u32 16, %s19
          %s149 = smul.u32 2, %s20
          %p150 = scmp.lt.s32.totalorder %s148, 31
          %s151 = scalar_select %p150, %s148, 31
          %p152 = scmp.lt.s32.totalorder %s149, 1
          %s153 = scalar_select %p152, %s149, 1
          %s154 = smul.addr %s151, 2
          %s155 = sadd.s32 %s153, %s154
          %s156 = smul.addr %s155, 4
          %s157 = scalar_lea.vmem %s0, %s156
          %s158 = smul.u32 16, %s19
          %s159 = smul.u32 2, %s20
        $region28: #{gcn_forward_padded.11} parent=23 // pred_fallthru
          _
      $region24: #{gcn_forward_padded.11} parent=5 // pred_fallthru
        _
      %p160 = scmp.le.s32.totalorder 1, %s12
      %p161 = scmp.lt.s32.totalorder %s12, 3
      %p162 = pnand %p160, %p161
      %p163 = pneg %p162
      // Predicated region
      $region29: #{gcn_forward_padded.11} parent=5 // pred_check
        _
      $region30: #{gcn_forward_padded.11} parent=5 // pred_check_branch
        %165 = sbr.rel (%p162) target = $region32
      $region31: #{gcn_forward_padded.11} parent=5 // pred_region
        %s166 = ssub.s32 %s12, 1
        %s167 = smul.u32 16, %s21
        %s168 = smul.u32 2, %s22
        %p169 = scmp.lt.s32.totalorder %s167, 31
        %s170 = scalar_select %p169, %s167, 31
        %p171 = scmp.lt.s32.totalorder %s168, 1
        %s172 = scalar_select %p171, %s168, 1
        %s173 = smul.addr %s170, 2
        %s174 = sadd.s32 %s172, %s173
        %s175 = smul.addr %s174, 4
        %s176 = scalar_lea.vmem %s0, %s175
        %p177 = pneg %p52
        %p178 = pneg %p49
        %p179 = pneg %p73
        %p180 = pneg %p70
        %p181 = pneg %p94
        %p182 = pneg %p91
        %p183 = pneg %p120
        %p184 = pneg %p117
        %s185 = sand.u32 %s107, 1
        %s186 = scalar_lea.sflag [#allocation3], %s185
        %s187 = sand.u32 %s107, 1
        %s188 = smul.addr %s187, 128
        %s189 = scalar_lea.vmem [#allocation2], %s188
        %s190 = smul.u32 16, %s21
        %s191 = smul.u32 2, %s22
        %p192 = scmp.lt.s32.totalorder %s190, 31
        %s193 = scalar_select %p192, %s190, 31
        %p194 = scmp.lt.s32.totalorder %s191, 1
        %s195 = scalar_select %p194, %s191, 1
        %s196 = smul.addr %s193, 2
        %s197 = sadd.s32 %s195, %s196
        %s198 = smul.addr %s197, 4
        %s199 = scalar_lea.vmem %s0, %s198
        %s200 = smul.u32 16, %s21
        %s201 = smul.u32 2, %s22
        %s202 = smul.u32 16, %s21
        %p204 = scmp.eq.s32.totalorder %s22, 0
        // Predicated region
        $region33: #{gcn_forward_padded.11} parent=31 // pred_check
          %p205 = pneg %p204
        $region34: #{gcn_forward_padded.11} parent=31 // pred_check_branch
          %207 = sbr.rel (%p205) target = $region36
        $region35: #{gcn_forward_padded.11} parent=31 // pred_region
          %v208 = vld [vmem:[%s2] sm:$0x1]
          %v210 = vlaneseq
          %v211 = vshrl.u32 %v210, 7
          %v212 = vsub.s32 0, %v211
          %v213 = vrot.slane %v208, %v212
          %215 = vst [vmem:[%s189] sm:$0xff] %v213
          %216 = vst [vmem:[%s189 + $0x8] sm:$0xff] %v213
          %217 = vst [vmem:[%s189 + $0x10] sm:$0xff] %v213
          %218 = vst [vmem:[%s189 + $0x18] sm:$0xff] %v213
          %219 = vst [vmem:[%s189 + $0x20] sm:$0xff] %v213
          %220 = vst [vmem:[%s189 + $0x28] sm:$0xff] %v213
          %221 = vst [vmem:[%s189 + $0x30] sm:$0xff] %v213
          %222 = vst [vmem:[%s189 + $0x38] sm:$0xff] %v213
          %223 = vst [vmem:[%s189 + $0x40] sm:$0xff] %v213
          %224 = vst [vmem:[%s189 + $0x48] sm:$0xff] %v213
          %225 = vst [vmem:[%s189 + $0x50] sm:$0xff] %v213
          %226 = vst [vmem:[%s189 + $0x58] sm:$0xff] %v213
          %227 = vst [vmem:[%s189 + $0x60] sm:$0xff] %v213
          %228 = vst [vmem:[%s189 + $0x68] sm:$0xff] %v213
          %229 = vst [vmem:[%s189 + $0x70] sm:$0xff] %v213
          %230 = vst [vmem:[%s189 + $0x78] sm:$0xff] %v213
        $region36: #{gcn_forward_padded.11} parent=31 // pred_fallthru
          _
        %s231 = smul.u32 %s22, 256
        %s232 = sshra.s32 %s231, 3
        %s233 = sand.u32 %s231, 7
        %s234 = smul.addr %s232, 4
        %s235 = scalar_lea.vmem %s1, %s234
        %v236 = vld [vmem:[%s235] sm:$0xf]
        %v237 = vld [vmem:[%s235 + $0x4] sm:$0xf]
        %v238 = vld [vmem:[%s235 + $0x8] sm:$0xf]
        %v239 = vld [vmem:[%s235 + $0xc] sm:$0xf]
        %v240 = vld [vmem:[%s235 + $0x10] sm:$0xf]
        %v241 = vld [vmem:[%s235 + $0x14] sm:$0xf]
        %v242 = vld [vmem:[%s235 + $0x18] sm:$0xf]
        %v243 = vld [vmem:[%s235 + $0x1c] sm:$0xf]
        %v244 = vld [vmem:[%s235 + $0x20] sm:$0xf]
        %v245 = vld [vmem:[%s235 + $0x24] sm:$0xf]
        %v246 = vld [vmem:[%s235 + $0x28] sm:$0xf]
        %v247 = vld [vmem:[%s235 + $0x2c] sm:$0xf]
        %v248 = vld [vmem:[%s235 + $0x30] sm:$0xf]
        %v249 = vld [vmem:[%s235 + $0x34] sm:$0xf]
        %v250 = vld [vmem:[%s235 + $0x38] sm:$0xf]
        %v251 = vld [vmem:[%s235 + $0x3c] sm:$0xf]
        %v252 = vld [vmem:[%s235 + $0x40] sm:$0xf]
        %v253 = vld [vmem:[%s235 + $0x44] sm:$0xf]
        %v254 = vld [vmem:[%s235 + $0x48] sm:$0xf]
        %v255 = vld [vmem:[%s235 + $0x4c] sm:$0xf]
        %v256 = vld [vmem:[%s235 + $0x50] sm:$0xf]
        %v257 = vld [vmem:[%s235 + $0x54] sm:$0xf]
        %v258 = vld [vmem:[%s235 + $0x58] sm:$0xf]
        %v259 = vld [vmem:[%s235 + $0x5c] sm:$0xf]
        %v260 = vld [vmem:[%s235 + $0x60] sm:$0xf]
        %v261 = vld [vmem:[%s235 + $0x64] sm:$0xf]
        %v262 = vld [vmem:[%s235 + $0x68] sm:$0xf]
        %v263 = vld [vmem:[%s235 + $0x6c] sm:$0xf]
        %v264 = vld [vmem:[%s235 + $0x70] sm:$0xf]
        %v265 = vld [vmem:[%s235 + $0x74] sm:$0xf]
        %v266 = vld [vmem:[%s235 + $0x78] sm:$0xf]
        %v267 = vld [vmem:[%s235 + $0x7c] sm:$0xf]
        %v268 = vld [vmem:[%s189] sm:$0xff]
        %v269 = vld [vmem:[%s189 + $0x8] sm:$0xff]
        %v270 = vld [vmem:[%s189 + $0x10] sm:$0xff]
        %v271 = vld [vmem:[%s189 + $0x18] sm:$0xff]
        %v272 = vld [vmem:[%s189 + $0x20] sm:$0xff]
        %v273 = vld [vmem:[%s189 + $0x28] sm:$0xff]
        %v274 = vld [vmem:[%s189 + $0x30] sm:$0xff]
        %v275 = vld [vmem:[%s189 + $0x38] sm:$0xff]
        %v276 = vld [vmem:[%s189 + $0x40] sm:$0xff]
        %v277 = vld [vmem:[%s189 + $0x48] sm:$0xff]
        %v278 = vld [vmem:[%s189 + $0x50] sm:$0xff]
        %v279 = vld [vmem:[%s189 + $0x58] sm:$0xff]
        %v280 = vld [vmem:[%s189 + $0x60] sm:$0xff]
        %v281 = vld [vmem:[%s189 + $0x68] sm:$0xff]
        %v282 = vld [vmem:[%s189 + $0x70] sm:$0xff]
        %v283 = vld [vmem:[%s189 + $0x78] sm:$0xff]
        %v284 = vld [vmem:[%s199] sm:$0xff]
        %v285 = vld [vmem:[%s199 + $0x8] sm:$0xff]
        %v286 = vld [vmem:[%s199 + $0x10] sm:$0xff]
        %v287 = vld [vmem:[%s199 + $0x18] sm:$0xff]
        %v288 = vld [vmem:[%s199 + $0x20] sm:$0xff]
        %v289 = vld [vmem:[%s199 + $0x28] sm:$0xff]
        %v290 = vld [vmem:[%s199 + $0x30] sm:$0xff]
        %v291 = vld [vmem:[%s199 + $0x38] sm:$0xff]
        %v292 = vld [vmem:[%s199 + $0x40] sm:$0xff]
        %v293 = vld [vmem:[%s199 + $0x48] sm:$0xff]
        %v294 = vld [vmem:[%s199 + $0x50] sm:$0xff]
        %v295 = vld [vmem:[%s199 + $0x58] sm:$0xff]
        %v296 = vld [vmem:[%s199 + $0x60] sm:$0xff]
        %v297 = vld [vmem:[%s199 + $0x68] sm:$0xff]
        %v298 = vld [vmem:[%s199 + $0x70] sm:$0xff]
        %v299 = vld [vmem:[%s199 + $0x78] sm:$0xff]
        %v316 = vunpack.c.l.b16 %v284
        %v317 = vunpack.c.h.b16 %v284
        %v318 = vunpack.c.l.b16 %v285
        %v319 = vunpack.c.h.b16 %v285
        %v320 = vunpack.c.l.b16 %v286
        %v321 = vunpack.c.h.b16 %v286
        %v322 = vunpack.c.l.b16 %v287
        %v323 = vunpack.c.h.b16 %v287
        %v324 = vunpack.c.l.b16 %v288
        %v325 = vunpack.c.h.b16 %v288
        %v326 = vunpack.c.l.b16 %v289
        %v327 = vunpack.c.h.b16 %v289
        %v328 = vunpack.c.l.b16 %v290
        %v329 = vunpack.c.h.b16 %v290
        %v330 = vunpack.c.l.b16 %v291
        %v331 = vunpack.c.h.b16 %v291
        %v332 = vunpack.c.l.b16 %v292
        %v333 = vunpack.c.h.b16 %v292
        %v334 = vunpack.c.l.b16 %v293
        %v335 = vunpack.c.h.b16 %v293
        %v336 = vunpack.c.l.b16 %v294
        %v337 = vunpack.c.h.b16 %v294
        %v338 = vunpack.c.l.b16 %v295
        %v339 = vunpack.c.h.b16 %v295
        %v340 = vunpack.c.l.b16 %v296
        %v341 = vunpack.c.h.b16 %v296
        %v342 = vunpack.c.l.b16 %v297
        %v343 = vunpack.c.h.b16 %v297
        %v344 = vunpack.c.l.b16 %v298
        %v345 = vunpack.c.h.b16 %v298
        %v346 = vunpack.c.l.b16 %v299
        %v347 = vunpack.c.h.b16 %v299
        %v348 = vpack.c.b16 %v318, %v316
        %v349 = vpack.c.b16 %v319, %v317
        %v350 = vpack.c.b16 %v322, %v320
        %v351 = vpack.c.b16 %v323, %v321
        %v352 = vpack.c.b16 %v326, %v324
        %v353 = vpack.c.b16 %v327, %v325
        %v354 = vpack.c.b16 %v330, %v328
        %v355 = vpack.c.b16 %v331, %v329
        %v356 = vpack.c.b16 %v334, %v332
        %v357 = vpack.c.b16 %v335, %v333
        %v358 = vpack.c.b16 %v338, %v336
        %v359 = vpack.c.b16 %v339, %v337
        %v360 = vpack.c.b16 %v342, %v340
        %v361 = vpack.c.b16 %v343, %v341
        %v362 = vpack.c.b16 %v346, %v344
        %v363 = vpack.c.b16 %v347, %v345
        %v412 = vunpack.c.l.b16 %v236
        %v413 = vunpack.c.l.b16 %v237
        %v414 = vunpack.c.l.b16 %v238
        %v415 = vunpack.c.l.b16 %v239
        %v416 = vunpack.c.l.b16 %v240
        %v417 = vunpack.c.l.b16 %v241
        %v418 = vunpack.c.l.b16 %v242
        %v419 = vunpack.c.l.b16 %v243
        %v420 = vunpack.c.l.b16 %v244
        %v421 = vunpack.c.l.b16 %v245
        %v422 = vunpack.c.l.b16 %v246
        %v423 = vunpack.c.l.b16 %v247
        %v424 = vunpack.c.l.b16 %v248
        %v425 = vunpack.c.l.b16 %v249
        %v426 = vunpack.c.l.b16 %v250
        %v427 = vunpack.c.l.b16 %v251
        %v428 = vunpack.c.l.b16 %v252
        %v429 = vunpack.c.l.b16 %v253
        %v430 = vunpack.c.l.b16 %v254
        %v431 = vunpack.c.l.b16 %v255
        %v432 = vunpack.c.l.b16 %v256
        %v433 = vunpack.c.l.b16 %v257
        %v434 = vunpack.c.l.b16 %v258
        %v435 = vunpack.c.l.b16 %v259
        %v436 = vunpack.c.l.b16 %v260
        %v437 = vunpack.c.l.b16 %v261
        %v438 = vunpack.c.l.b16 %v262
        %v439 = vunpack.c.l.b16 %v263
        %v440 = vunpack.c.l.b16 %v264
        %v441 = vunpack.c.l.b16 %v265
        %v442 = vunpack.c.l.b16 %v266
        %v443 = vunpack.c.l.b16 %v267
        %v444 = vpack.c.b16 %v413, %v412
        %v445 = vpack.c.b16 %v415, %v414
        %v446 = vpack.c.b16 %v417, %v416
        %v447 = vpack.c.b16 %v419, %v418
        %v448 = vpack.c.b16 %v421, %v420
        %v449 = vpack.c.b16 %v423, %v422
        %v450 = vpack.c.b16 %v425, %v424
        %v451 = vpack.c.b16 %v427, %v426
        %v452 = vpack.c.b16 %v429, %v428
        %v453 = vpack.c.b16 %v431, %v430
        %v454 = vpack.c.b16 %v433, %v432
        %v455 = vpack.c.b16 %v435, %v434
        %v456 = vpack.c.b16 %v437, %v436
        %v457 = vpack.c.b16 %v439, %v438
        %v458 = vpack.c.b16 %v441, %v440
        %v459 = vpack.c.b16 %v443, %v442
        %476 = vmatprep.subr.bf16.mxu0 0
        %477 = vmatpush1.bf16.msra.mxu0 %v444
        %478 = vmatprep.subr.bf16.mxu0 0
        %479 = vmatpush1.bf16.msra.mxu0 %v445
        %480 = vmatprep.subr.bf16.mxu0 0
        %481 = vmatpush1.bf16.msra.mxu0 %v446
        %482 = vmatprep.subr.bf16.mxu0 0
        %483 = vmatpush1.bf16.msra.mxu0 %v447
        %484 = vmatprep.subr.bf16.mxu0 0
        %485 = vmatpush1.bf16.msra.mxu0 %v448
        %486 = vmatprep.subr.bf16.mxu0 0
        %487 = vmatpush1.bf16.msra.mxu0 %v449
        %488 = vmatprep.subr.bf16.mxu0 0
        %489 = vmatpush1.bf16.msra.mxu0 %v450
        %490 = vmatprep.subr.bf16.mxu0 0
        %491 = vmatpush1.bf16.msra.mxu0 %v451
        %492 = vmatprep.subr.bf16.mxu0 0
        %493 = vmatpush1.bf16.msra.mxu0 %v452
        %494 = vmatprep.subr.bf16.mxu0 0
        %495 = vmatpush1.bf16.msra.mxu0 %v453
        %496 = vmatprep.subr.bf16.mxu0 0
        %497 = vmatpush1.bf16.msra.mxu0 %v454
        %498 = vmatprep.subr.bf16.mxu0 0
        %499 = vmatpush1.bf16.msra.mxu0 %v455
        %500 = vmatprep.subr.bf16.mxu0 0
        %501 = vmatpush1.bf16.msra.mxu0 %v456
        %502 = vmatprep.subr.bf16.mxu0 0
        %503 = vmatpush1.bf16.msra.mxu0 %v457
        %504 = vmatprep.subr.bf16.mxu0 0
        %505 = vmatpush1.bf16.msra.mxu0 %v458
        %506 = vmatprep.subr.bf16.mxu0 0
        %507 = vmatpush1.bf16.msra.mxu0 %v459
        %508 = vmatprep.mubr.bf16.mxu0 %v349
        %509 = vmatmul.mubr.bf16.gmra.mrb[0].mxu0 %v348
        %v510 = vpop.f32.mrb[0].mxu0
        %v511 = vadd.f32 0.0, %v510
        %v512 = vpop.f32.mrb[0].mxu0
        %v513 = vpop.f32.mrb[0].mxu0
        %v514 = vadd.f32 0.0, %v513
        %v515 = vpop.f32.mrb[0].mxu0
        %516 = vmatprep.mubr.bf16.mxu0 %v351
        %517 = vmatmul.mubr.bf16.gmra.mrb[0].mxu0 %v350
        %v518 = vpop.f32.mrb[0].mxu0
        %v519 = vadd.f32 0.0, %v518
        %v520 = vpop.f32.mrb[0].mxu0
        %v521 = vpop.f32.mrb[0].mxu0
        %v522 = vadd.f32 0.0, %v521
        %v523 = vpop.f32.mrb[0].mxu0
        %524 = vmatprep.mubr.bf16.mxu0 %v353
        %525 = vmatmul.mubr.bf16.gmra.mrb[0].mxu0 %v352
        %v526 = vpop.f32.mrb[0].mxu0
        %v527 = vadd.f32 0.0, %v526
        %v528 = vpop.f32.mrb[0].mxu0
        %v529 = vpop.f32.mrb[0].mxu0
        %v530 = vadd.f32 0.0, %v529
        %v531 = vpop.f32.mrb[0].mxu0
        %532 = vmatprep.mubr.bf16.mxu0 %v355
        %533 = vmatmul.mubr.bf16.gmra.mrb[0].mxu0 %v354
        %v534 = vpop.f32.mrb[0].mxu0
        %v535 = vadd.f32 0.0, %v534
        %v536 = vpop.f32.mrb[0].mxu0
        %v537 = vpop.f32.mrb[0].mxu0
        %v538 = vadd.f32 0.0, %v537
        %v539 = vpop.f32.mrb[0].mxu0
        %540 = vmatprep.mubr.bf16.mxu0 %v357
        %541 = vmatmul.mubr.bf16.gmra.mrb[0].mxu0 %v356
        %v542 = vpop.f32.mrb[0].mxu0
        %v543 = vadd.f32 0.0, %v542
        %v544 = vpop.f32.mrb[0].mxu0
        %v545 = vpop.f32.mrb[0].mxu0
        %v546 = vadd.f32 0.0, %v545
        %v547 = vpop.f32.mrb[0].mxu0
        %548 = vmatprep.mubr.bf16.mxu0 %v359
        %549 = vmatmul.mubr.bf16.gmra.mrb[0].mxu0 %v358
        %v550 = vpop.f32.mrb[0].mxu0
        %v551 = vadd.f32 0.0, %v550
        %v552 = vpop.f32.mrb[0].mxu0
        %v553 = vpop.f32.mrb[0].mxu0
        %v554 = vadd.f32 0.0, %v553
        %v555 = vpop.f32.mrb[0].mxu0
        %556 = vmatprep.mubr.bf16.mxu0 %v361
        %557 = vmatmul.mubr.bf16.gmra.mrb[0].mxu0 %v360
        %v558 = vpop.f32.mrb[0].mxu0
        %v559 = vadd.f32 0.0, %v558
        %v560 = vpop.f32.mrb[0].mxu0
        %v561 = vpop.f32.mrb[0].mxu0
        %v562 = vadd.f32 0.0, %v561
        %v563 = vpop.f32.mrb[0].mxu0
        %564 = vmatprep.mubr.bf16.mxu0 %v363
        %565 = vmatmul.mubr.bf16.gmra.mrb[0].mxu0 %v362
        %v566 = vpop.f32.mrb[0].mxu0
        %v567 = vadd.f32 0.0, %v566
        %v568 = vpop.f32.mrb[0].mxu0
        %v569 = vpop.f32.mrb[0].mxu0
        %v570 = vadd.f32 0.0, %v569
        %v571 = vpop.f32.mrb[0].mxu0
        %572 = vdwg.mxu0
        %v573 = vadd.f32 %v268, %v511
        %v574 = vadd.f32 %v269, %v514
        %v575 = vadd.f32 %v270, %v519
        %v576 = vadd.f32 %v271, %v522
        %v577 = vadd.f32 %v272, %v527
        %v578 = vadd.f32 %v273, %v530
        %v579 = vadd.f32 %v274, %v535
        %v580 = vadd.f32 %v275, %v538
        %v581 = vadd.f32 %v276, %v543
        %v582 = vadd.f32 %v277, %v546
        %v583 = vadd.f32 %v278, %v551
        %v584 = vadd.f32 %v279, %v554
        %v585 = vadd.f32 %v280, %v559
        %v586 = vadd.f32 %v281, %v562
        %v587 = vadd.f32 %v282, %v567
        %v588 = vadd.f32 %v283, %v570
        %589 = vst [vmem:[%s189] sm:$0xff] %v573
        %590 = vst [vmem:[%s189 + $0x8] sm:$0xff] %v574
        %591 = vst [vmem:[%s189 + $0x10] sm:$0xff] %v575
        %592 = vst [vmem:[%s189 + $0x18] sm:$0xff] %v576
        %593 = vst [vmem:[%s189 + $0x20] sm:$0xff] %v577
        %594 = vst [vmem:[%s189 + $0x28] sm:$0xff] %v578
        %595 = vst [vmem:[%s189 + $0x30] sm:$0xff] %v579
        %596 = vst [vmem:[%s189 + $0x38] sm:$0xff] %v580
        %597 = vst [vmem:[%s189 + $0x40] sm:$0xff] %v581
        %598 = vst [vmem:[%s189 + $0x48] sm:$0xff] %v582
        %599 = vst [vmem:[%s189 + $0x50] sm:$0xff] %v583
        %600 = vst [vmem:[%s189 + $0x58] sm:$0xff] %v584
        %601 = vst [vmem:[%s189 + $0x60] sm:$0xff] %v585
        %602 = vst [vmem:[%s189 + $0x68] sm:$0xff] %v586
        %603 = vst [vmem:[%s189 + $0x70] sm:$0xff] %v587
        %604 = vst [vmem:[%s189 + $0x78] sm:$0xff] %v588
        // Predicated region
        $region37: #{gcn_forward_padded.11} parent=31 // pred_check
          %p605 = pneg %p204
        $region38: #{gcn_forward_padded.11} parent=31 // pred_check_branch
          %607 = sbr.rel (%p605) target = $region40
        $region39: #{gcn_forward_padded.11} parent=31 // pred_region
          %v608 = vld [vmem:[%s189] sm:$0xff]
          %v609 = vld [vmem:[%s189 + $0x8] sm:$0xff]
          %v610 = vld [vmem:[%s189 + $0x10] sm:$0xff]
          %v611 = vld [vmem:[%s189 + $0x18] sm:$0xff]
          %v612 = vld [vmem:[%s189 + $0x20] sm:$0xff]
          %v613 = vld [vmem:[%s189 + $0x28] sm:$0xff]
          %v614 = vld [vmem:[%s189 + $0x30] sm:$0xff]
          %v615 = vld [vmem:[%s189 + $0x38] sm:$0xff]
          %v616 = vld [vmem:[%s189 + $0x40] sm:$0xff]
          %v617 = vld [vmem:[%s189 + $0x48] sm:$0xff]
          %v618 = vld [vmem:[%s189 + $0x50] sm:$0xff]
          %v619 = vld [vmem:[%s189 + $0x58] sm:$0xff]
          %v620 = vld [vmem:[%s189 + $0x60] sm:$0xff]
          %v621 = vld [vmem:[%s189 + $0x68] sm:$0xff]
          %v622 = vld [vmem:[%s189 + $0x70] sm:$0xff]
          %v623 = vld [vmem:[%s189 + $0x78] sm:$0xff]
          %v624 = vlaneseq
          %v625 = vand.u32 %v624, 127
          %vm626 = vcmp.lt.s32.totalorder %v625, 16
          %v627 = vsel %vm626, %v608, -inf
          %v628 = vsel %vm626, %v609, -inf
          %v629 = vsel %vm626, %v610, -inf
          %v630 = vsel %vm626, %v611, -inf
          %v631 = vsel %vm626, %v612, -inf
          %v632 = vsel %vm626, %v613, -inf
          %v633 = vsel %vm626, %v614, -inf
          %v634 = vsel %vm626, %v615, -inf
          %v635 = vsel %vm626, %v616, -inf
          %v636 = vsel %vm626, %v617, -inf
          %v637 = vsel %vm626, %v618, -inf
          %v638 = vsel %vm626, %v619, -inf
          %v639 = vsel %vm626, %v620, -inf
          %v640 = vsel %vm626, %v621, -inf
          %v641 = vsel %vm626, %v622, -inf
          %v642 = vsel %vm626, %v623, -inf
          %643 = vmax.xlane.f32.xlu0 %v627
          %v644 = vpop.xlane.xlu0 %643
          %645 = vmax.xlane.f32.xlu0 %v628
          %v646 = vpop.xlane.xlu0 %645
          %647 = vmax.xlane.f32.xlu0 %v629
          %v648 = vpop.xlane.xlu0 %647
          %649 = vmax.xlane.f32.xlu0 %v630
          %v650 = vpop.xlane.xlu0 %649
          %651 = vmax.xlane.f32.xlu0 %v631
          %v652 = vpop.xlane.xlu0 %651
          %653 = vmax.xlane.f32.xlu0 %v632
          %v654 = vpop.xlane.xlu0 %653
          %655 = vmax.xlane.f32.xlu0 %v633
          %v656 = vpop.xlane.xlu0 %655
          %657 = vmax.xlane.f32.xlu0 %v634
          %v658 = vpop.xlane.xlu0 %657
          %659 = vmax.xlane.f32.xlu0 %v635
          %v660 = vpop.xlane.xlu0 %659
          %661 = vmax.xlane.f32.xlu0 %v636
          %v662 = vpop.xlane.xlu0 %661
          %663 = vmax.xlane.f32.xlu0 %v637
          %v664 = vpop.xlane.xlu0 %663
          %665 = vmax.xlane.f32.xlu0 %v638
          %v666 = vpop.xlane.xlu0 %665
          %667 = vmax.xlane.f32.xlu0 %v639
          %v668 = vpop.xlane.xlu0 %667
          %669 = vmax.xlane.f32.xlu0 %v640
          %v670 = vpop.xlane.xlu0 %669
          %671 = vmax.xlane.f32.xlu0 %v641
          %v672 = vpop.xlane.xlu0 %671
          %673 = vmax.xlane.f32.xlu0 %v642
          %v674 = vpop.xlane.xlu0 %673
          %v675 = vsub.f32 %v627, %v644
          %v676 = vsub.f32 %v628, %v646
          %v677 = vsub.f32 %v629, %v648
          %v678 = vsub.f32 %v630, %v650
          %v679 = vsub.f32 %v631, %v652
          %v680 = vsub.f32 %v632, %v654
          %v681 = vsub.f32 %v633, %v656
          %v682 = vsub.f32 %v634, %v658
          %v683 = vsub.f32 %v635, %v660
          %v684 = vsub.f32 %v636, %v662
          %v685 = vsub.f32 %v637, %v664
          %v686 = vsub.f32 %v638, %v666
          %v687 = vsub.f32 %v639, %v668
          %v688 = vsub.f32 %v640, %v670
          %v689 = vsub.f32 %v641, %v672
          %v690 = vsub.f32 %v642, %v674
          %v691 = vmul.f32 %v675, 1.442695
          %v692 = vpow.pop %v691
          %v693 = vmul.f32 %v676, 1.442695
          %v694 = vpow.pop %v693
          %v695 = vmul.f32 %v677, 1.442695
          %v696 = vpow.pop %v695
          %v697 = vmul.f32 %v678, 1.442695
          %v698 = vpow.pop %v697
          %v699 = vmul.f32 %v679, 1.442695
          %v700 = vpow.pop %v699
          %v701 = vmul.f32 %v680, 1.442695
          %v702 = vpow.pop %v701
          %v703 = vmul.f32 %v681, 1.442695
          %v704 = vpow.pop %v703
          %v705 = vmul.f32 %v682, 1.442695
          %v706 = vpow.pop %v705
          %v707 = vmul.f32 %v683, 1.442695
          %v708 = vpow.pop %v707
          %v709 = vmul.f32 %v684, 1.442695
          %v710 = vpow.pop %v709
          %v711 = vmul.f32 %v685, 1.442695
          %v712 = vpow.pop %v711
          %v713 = vmul.f32 %v686, 1.442695
          %v714 = vpow.pop %v713
          %v715 = vmul.f32 %v687, 1.442695
          %v716 = vpow.pop %v715
          %v717 = vmul.f32 %v688, 1.442695
          %v718 = vpow.pop %v717
          %v719 = vmul.f32 %v689, 1.442695
          %v720 = vpow.pop %v719
          %v721 = vmul.f32 %v690, 1.442695
          %v722 = vpow.pop %v721
          %723 = vadd.xlane.f32.xlu0 %v692
          %v724 = vpop.xlane.xlu0 %723
          %725 = vadd.xlane.f32.xlu0 %v694
          %v726 = vpop.xlane.xlu0 %725
          %727 = vadd.xlane.f32.xlu0 %v696
          %v728 = vpop.xlane.xlu0 %727
          %729 = vadd.xlane.f32.xlu0 %v698
          %v730 = vpop.xlane.xlu0 %729
          %731 = vadd.xlane.f32.xlu0 %v700
          %v732 = vpop.xlane.xlu0 %731
          %733 = vadd.xlane.f32.xlu0 %v702
          %v734 = vpop.xlane.xlu0 %733
          %735 = vadd.xlane.f32.xlu0 %v704
          %v736 = vpop.xlane.xlu0 %735
          %737 = vadd.xlane.f32.xlu0 %v706
          %v738 = vpop.xlane.xlu0 %737
          %739 = vadd.xlane.f32.xlu0 %v708
          %v740 = vpop.xlane.xlu0 %739
          %741 = vadd.xlane.f32.xlu0 %v710
          %v742 = vpop.xlane.xlu0 %741
          %743 = vadd.xlane.f32.xlu0 %v712
          %v744 = vpop.xlane.xlu0 %743
          %745 = vadd.xlane.f32.xlu0 %v714
          %v746 = vpop.xlane.xlu0 %745
          %747 = vadd.xlane.f32.xlu0 %v716
          %v748 = vpop.xlane.xlu0 %747
          %749 = vadd.xlane.f32.xlu0 %v718
          %v750 = vpop.xlane.xlu0 %749
          %751 = vadd.xlane.f32.xlu0 %v720
          %v752 = vpop.xlane.xlu0 %751
          %753 = vadd.xlane.f32.xlu0 %v722
          %v754 = vpop.xlane.xlu0 %753
          %v755 = vlog2.pop %v724
          %v756 = vmul.f32 %v755, 0.6931472
          %v757 = vlog2.pop %v726
          %v758 = vmul.f32 %v757, 0.6931472
          %v759 = vlog2.pop %v728
          %v760 = vmul.f32 %v759, 0.6931472
          %v761 = vlog2.pop %v730
          %v762 = vmul.f32 %v761, 0.6931472
          %v763 = vlog2.pop %v732
          %v764 = vmul.f32 %v763, 0.6931472
          %v765 = vlog2.pop %v734
          %v766 = vmul.f32 %v765, 0.6931472
          %v767 = vlog2.pop %v736
          %v768 = vmul.f32 %v767, 0.6931472
          %v769 = vlog2.pop %v738
          %v770 = vmul.f32 %v769, 0.6931472
          %v771 = vlog2.pop %v740
          %v772 = vmul.f32 %v771, 0.6931472
          %v773 = vlog2.pop %v742
          %v774 = vmul.f32 %v773, 0.6931472
          %v775 = vlog2.pop %v744
          %v776 = vmul.f32 %v775, 0.6931472
          %v777 = vlog2.pop %v746
          %v778 = vmul.f32 %v777, 0.6931472
          %v779 = vlog2.pop %v748
          %v780 = vmul.f32 %v779, 0.6931472
          %v781 = vlog2.pop %v750
          %v782 = vmul.f32 %v781, 0.6931472
          %v783 = vlog2.pop %v752
          %v784 = vmul.f32 %v783, 0.6931472
          %v785 = vlog2.pop %v754
          %v786 = vmul.f32 %v785, 0.6931472
          %v787 = vsub.f32 %v675, %v756
          %v788 = vsub.f32 %v676, %v758
          %v789 = vsub.f32 %v677, %v760
          %v790 = vsub.f32 %v678, %v762
          %v791 = vsub.f32 %v679, %v764
          %v792 = vsub.f32 %v680, %v766
          %v793 = vsub.f32 %v681, %v768
          %v794 = vsub.f32 %v682, %v770
          %v795 = vsub.f32 %v683, %v772
          %v796 = vsub.f32 %v684, %v774
          %v797 = vsub.f32 %v685, %v776
          %v798 = vsub.f32 %v686, %v778
          %v799 = vsub.f32 %v687, %v780
          %v800 = vsub.f32 %v688, %v782
          %v801 = vsub.f32 %v689, %v784
          %v802 = vsub.f32 %v690, %v786
          %803 = vst [vmem:[%s189] sm:$0xff] %v787
          %804 = vst [vmem:[%s189 + $0x8] sm:$0xff] %v788
          %805 = vst [vmem:[%s189 + $0x10] sm:$0xff] %v789
          %806 = vst [vmem:[%s189 + $0x18] sm:$0xff] %v790
          %807 = vst [vmem:[%s189 + $0x20] sm:$0xff] %v791
          %808 = vst [vmem:[%s189 + $0x28] sm:$0xff] %v792
          %809 = vst [vmem:[%s189 + $0x30] sm:$0xff] %v793
          %810 = vst [vmem:[%s189 + $0x38] sm:$0xff] %v794
          %811 = vst [vmem:[%s189 + $0x40] sm:$0xff] %v795
          %812 = vst [vmem:[%s189 + $0x48] sm:$0xff] %v796
          %813 = vst [vmem:[%s189 + $0x50] sm:$0xff] %v797
          %814 = vst [vmem:[%s189 + $0x58] sm:$0xff] %v798
          %815 = vst [vmem:[%s189 + $0x60] sm:$0xff] %v799
          %816 = vst [vmem:[%s189 + $0x68] sm:$0xff] %v800
          %817 = vst [vmem:[%s189 + $0x70] sm:$0xff] %v801
          %818 = vst [vmem:[%s189 + $0x78] sm:$0xff] %v802
        $region40: #{gcn_forward_padded.11} parent=31 // pred_fallthru
          _
        %s819 = sand.u32 %s107, 1
        %s820 = scalar_lea.sflag [#allocation3], %s819
        %s821 = sand.u32 %s107, 1
        %s822 = smul.addr %s821, 128
        %s823 = scalar_lea.vmem [#allocation2], %s822
        // Predicated region
        $region41: #{gcn_forward_padded.11} parent=31 // pred_check
          %p824 = pneg %p117
        $region42: #{gcn_forward_padded.11} parent=31 // pred_check_branch
          %826 = sbr.rel (%p824) target = $region44
        $region43: #{gcn_forward_padded.11} parent=31 // pred_region
          %s827 = smul.u32 16, %s21
          %s829 = ssub.s32 2048, 2048
          %830 = vsyncadd %s820, %s829
          %s831 = smul.addr %s827, 128
          %s832 = scalar_lea.hbm %s3, %s831
          %s833 = sshll.u32 %s823, 4
          %s834 = int_to_ptr.vmem [resolvable:$true] %s833
          %839 = dma.vmem_to_hbm [thread:$0]  %s834, 2048, %s832, %s820, 128, 128, 8
        $region44: #{gcn_forward_padded.11} parent=31 // pred_fallthru
          _
      $region32: #{gcn_forward_padded.11} parent=5 // pred_fallthru
        _
      %p840 = scmp.le.s32.totalorder 2, %s12
      // Predicated region
      $region45: #{gcn_forward_padded.11} parent=5 // pred_check
        %p841 = pneg %p840
      $region46: #{gcn_forward_padded.11} parent=5 // pred_check_branch
        %843 = sbr.rel (%p841) target = $region48
      $region47: #{gcn_forward_padded.11} parent=5 // pred_region
        %s844 = ssub.s32 %s12, 2
        // Predicated region
        $region49: #{gcn_forward_padded.11} parent=47 // pred_check
          %p845 = pneg %p123
        $region50: #{gcn_forward_padded.11} parent=47 // pred_check_branch
          %847 = sbr.rel (%p845) target = $region52
        $region51: #{gcn_forward_padded.11} parent=47 // pred_region
          %s848 = sand.u32 %s108, 1
          %s849 = scalar_lea.sflag [#allocation3], %s848
          %s850 = sand.u32 %s108, 1
          %s851 = smul.addr %s850, 128
          %s852 = scalar_lea.vmem [#allocation2], %s851
          %853 = dma.done %s849, 2048
        $region52: #{gcn_forward_padded.11} parent=47 // pred_fallthru
          _
      $region48: #{gcn_forward_padded.11} parent=5 // pred_fallthru
        _
    $region6: #{gcn_forward_padded.11} parent=1 // loop_footer
      %s16 = sadd.s32 1, %s12
    $region7: #{gcn_forward_padded.11} parent=1 // loop_footer_branch
      %11 = sbr.rel target = $region3
    $region8: #{gcn_forward_padded.11} parent=1 // loop_exit
      _
    %854 = vsyncpa [#allocation3], 1
    %s855 = scalar_lea.sflag [#allocation3], 1
    %856 = vsyncpa %s855, 1

</llo_original>
